<compile_context>
chip_gen: v6e
topology: v6e:2x2x1
jax: 0.10.0
libtpu: 0.0.40
codegen_flags: <defaults>
</compile_context>

<pallas_src>
import functools

import jax
import jax.numpy as jnp
from jax.experimental import pallas as pl
from jax.experimental.pallas import tpu as pltpu


# ----------------------------- Pallas kernel --------------------------------
def _fused_sage_kernel(
    a_ref,       # (tm, tk)           bf16  adjacency tile (exact edge counts)
    x_ref,       # (n_pad, fin_pad)   bf16  resident input features
    dinv_ref,    # (tm, 1)            f32   1 / in-degree for this row block
    wl1_ref,     # (fin_pad, hid_pad) bf16
    wr1_ref,     # (fin_pad, hid_pad) bf16
    b1_ref,      # (1, hid_pad)       f32
    wl2_ref,     # (hid_pad, out_pad) bf16
    wr2_ref,     # (hid_pad, out_pad) bf16
    b2_ref,      # (1, out_pad)       f32
    hid_ref,     # (tm, hid_pad)      f32   output: hidden (post-ReLU conv1)
    out_ref,     # (tm, out_pad)      f32   output: conv2
    acc_ref,     # (tm, max(fin_pad, hid_pad)) f32 accumulator
    h_vmem_ref,  # (n_pad, hid_pad)   bf16  resident hidden matrix (layer-2 input)
    hid0_ref,    # (tm, hid_pad)      f32   exact copy of hidden row-block 0
    *, tm, tk, fin_pad, hid_pad,
):
    layer = pl.program_id(0)
    i = pl.program_id(1)
    k = pl.program_id(2)
    nk = pl.num_programs(2)

    # ---- init accumulator at the start of every K reduction -----------------
    @pl.when(k == 0)
    def _():
        acc_ref[...] = jnp.zeros_like(acc_ref)

    a = a_ref[...]                                   # (tm, tk) bf16
    k_start = pl.multiple_of(k * tk, tk)

    # ---- layer 0: accumulate A @ X  (X resident, sliced per K block) ---------
    @pl.when(layer == 0)
    def _():
        x_k = x_ref[pl.ds(k_start, tk), :]           # (tk, fin_pad) bf16
        acc_ref[:, :fin_pad] += jnp.dot(a, x_k, preferred_element_type=jnp.float32)

    # ---- layer 1: accumulate A @ H  (H held in VMEM scratch) -----------------
    @pl.when(layer == 1)
    def _():
        h_k = h_vmem_ref[pl.ds(k_start, tk), :]      # (tk, hid_pad) bf16
        acc_ref[:, :hid_pad] += jnp.dot(a, h_k, preferred_element_type=jnp.float32)

    # ---- finalize at the end of the K reduction ------------------------------
    @pl.when(k == nk - 1)
    def _():
        row_start = pl.multiple_of(i * tm, tm)
        dinv = dinv_ref[...]                         # (tm, 1) f32 — mean normalization

        @pl.when(layer == 0)
        def _():
            agg = acc_ref[:, :fin_pad] * dinv        # f32 mean aggregation
            x_i = x_ref[pl.ds(row_start, tm), :]     # root/self rows (bf16)
            h = jnp.dot(agg.astype(jnp.bfloat16), wl1_ref[...],
                        preferred_element_type=jnp.float32)       # lin_l(agg)
            h = h + jnp.dot(x_i, wr1_ref[...],
                            preferred_element_type=jnp.float32)   # + lin_r(x)
            h = jnp.maximum(h + b1_ref[...], 0.0)                 # + bias, ReLU (f32)
            hid_ref[...] = h                                      # exact f32 writeback
            # keep hidden resident (bf16) for the second layer's aggregation
            h_vmem_ref[pl.ds(row_start, tm), :] = h.astype(jnp.bfloat16)

            # exact f32 copy of row-block 0: layer 1 pins hid_ref to block 0 and its
            # final grid-end writeback must carry the same (exact) data.
            @pl.when(i == 0)
            def _():
                hid0_ref[...] = h

        @pl.when(layer == 1)
        def _():
            agg2 = acc_ref[:, :hid_pad] * dinv                    # f32 mean aggregation
            h_i = h_vmem_ref[pl.ds(row_start, tm), :]             # (tm, hid_pad) bf16
            o = jnp.dot(agg2.astype(jnp.bfloat16), wl2_ref[...],
                        preferred_element_type=jnp.float32)       # lin_l(agg_h)
            o = o + jnp.dot(h_i, wr2_ref[...],
                            preferred_element_type=jnp.float32)   # + lin_r(h)
            out_ref[...] = o + b2_ref[...]
            # hid_ref is pinned to block 0 during the whole layer-1 pass; refresh it
            # from the exact f32 copy so its single writeback stays correct.
            hid_ref[...] = hid0_ref[...]


# ------------------------------- glue (JAX) ----------------------------------
def _round_up(x, m):
    return (x + m - 1) // m * m


def _pad2(a, rows, cols):
    r, c = a.shape
    return jnp.pad(a, ((0, rows - r), (0, cols - c)))


def _pick_tile(n_pad, cap):
    """Largest multiple of 128 that is <= cap and divides n_pad (n_pad % 128 == 0)."""
    if n_pad <= cap:
        return n_pad
    t = (cap // 128) * 128
    while t > 128 and n_pad % t:
        t -= 128
    return max(t, 128)


def _vmem_capacity_bytes():
    try:
        return int(pltpu.get_tpu_info().vmem_capacity_bytes)
    except Exception:
        return 64 * 1024 * 1024  # conservative fallback (v7x per-core VMEM)


def _vmem_bytes_estimate(n_pad, fin_pad, hid_pad, out_pad, tm, tk):
    buf = 2  # assume every pallas-managed block is double-buffered (conservative)
    a_tiles = buf * tm * tk * 2
    x_res = buf * n_pad * fin_pad * 2
    dinv = buf * tm * 128 * 4                       # (tm,1) pads to 128 lanes
    weights = buf * 2 * (fin_pad * hid_pad + hid_pad * out_pad) * 2
    biases = buf * 8 * (hid_pad + out_pad) * 4
    outs = buf * tm * (hid_pad + out_pad) * 4
    scratch = (tm * max(fin_pad, hid_pad) * 4       # f32 accumulator
               + n_pad * hid_pad * 2                # resident hidden (bf16)
               + tm * hid_pad * 4)                  # f32 hidden block-0 copy
    return a_tiles + x_res + dinv + weights + biases + outs + scratch


def build_adjacency_and_deg(edge_index, num_nodes, n_pad):
    """Exact edge-count adjacency A[i,j] = #edges j->i (bf16) + f32 inverse in-degree."""
    src = edge_index[0]
    dst = edge_index[1]
    adj = jnp.zeros((n_pad, n_pad), jnp.float32)
    adj = adj.at[dst, src].add(1.0)
    deg = jnp.sum(adj, axis=1, keepdims=True)
    deg_inv = jnp.where(deg > 0, 1.0 / jnp.maximum(deg, 1.0), 0.0).astype(jnp.float32)
    # Small integer counts are exactly representable in bf16; the 1/deg scaling is
    # applied in f32 inside the kernel, so no normalization error rides the A stream.
    return adj.astype(jnp.bfloat16), deg_inv


def sage_forward(x, edge_index, w_l1, w_r1, b1, w_l2, w_r2, b2):
    n, in_c = x.shape
    hid_c = w_l1.shape[1]
    out_c = w_l2.shape[1]

    # pad nodes and features to TPU-friendly sizes (lane-dense, (8,128)-tileable)
    n_pad = _round_up(max(n, 8), 128)
    fin_pad = _round_up(in_c, 128)
    hid_pad = _round_up(hid_c, 128)
    out_pad = _round_up(out_c, 128)

    # Bigger tiles than the per-grid-step overhead threshold; shrink to fit VMEM.
    tm = _pick_tile(n_pad, 512)    # output-row tile
    tk = _pick_tile(n_pad, 2048)   # neighbor (reduction) tile
    vmem_cap = _vmem_capacity_bytes()
    budget = int(vmem_cap * 0.80)
    while (_vmem_bytes_estimate(n_pad, fin_pad, hid_pad, out_pad, tm, tk) > budget
           and (tm > 128 or tk > 128)):
        if tk > 128:
            tk = _pick_tile(n_pad, max(tk // 2, 128))
        else:
            tm = _pick_tile(n_pad, max(tm // 2, 128))

    a, deg_inv = build_adjacency_and_deg(edge_index, n, n_pad)        # (n_pad,n_pad) bf16
    xp = _pad2(x.astype(jnp.float32), n_pad, fin_pad).astype(jnp.bfloat16)

    wl1 = _pad2(w_l1, fin_pad, hid_pad).astype(jnp.bfloat16)
    wr1 = _pad2(w_r1, fin_pad, hid_pad).astype(jnp.bfloat16)
    b1p = _pad2(b1, 1, hid_pad).astype(jnp.float32)
    wl2 = _pad2(w_l2, hid_pad, out_pad).astype(jnp.bfloat16)
    wr2 = _pad2(w_r2, hid_pad, out_pad).astype(jnp.bfloat16)
    b2p = _pad2(b2, 1, out_pad).astype(jnp.float32)

    kernel = functools.partial(
        _fused_sage_kernel, tm=tm, tk=tk, fin_pad=fin_pad, hid_pad=hid_pad)

    grid = (2, n_pad // tm, n_pad // tk)  # (layer, row block, K block) — reduction last

    est_vmem = _vmem_bytes_estimate(n_pad, fin_pad, hid_pad, out_pad, tm, tk)
    vmem_limit = min(max(32 * 1024 * 1024, int(est_vmem * 1.25)), int(vmem_cap * 0.85))

    flops = (2 * n_pad * n_pad * (fin_pad + hid_pad)   # A@X and A@H
             + 4 * n_pad * fin_pad * hid_pad           # conv1 lin_l + lin_r
             + 4 * n_pad * hid_pad * out_pad)          # conv2 lin_l + lin_r
    bytes_accessed = (2 * n_pad * n_pad * 2            # A streamed once per layer (bf16)
                      + n_pad * fin_pad * 2            # X fetched once (resident)
                      + 2 * n_pad * 4                  # deg_inv, once per layer
                      + 2 * (fin_pad * hid_pad + hid_pad * out_pad) * 2  # weights, once
                      + (hid_pad + out_pad) * 4        # biases
                      + (n_pad + tm) * hid_pad * 4     # hidden writeback (+ pinned block 0)
                      + n_pad * out_pad * 4)           # conv2 output writeback

    hidden_p, out_p = pl.pallas_call(
        kernel,
        out_shape=(
            jax.ShapeDtypeStruct((n_pad, hid_pad), jnp.float32),
            jax.ShapeDtypeStruct((n_pad, out_pad), jnp.float32),
        ),
        grid_spec=pltpu.PrefetchScalarGridSpec(
            num_scalar_prefetch=0,
            grid=grid,
            in_specs=[
                pl.BlockSpec((tm, tk), lambda l, i, k: (i, k)),            # A tile
                pl.BlockSpec((n_pad, fin_pad), lambda l, i, k: (0, 0)),    # X (resident)
                pl.BlockSpec((tm, 1), lambda l, i, k: (i, 0)),             # 1/deg row block
                pl.BlockSpec((fin_pad, hid_pad), lambda l, i, k: (0, 0)),  # W_l1 (resident)
                pl.BlockSpec((fin_pad, hid_pad), lambda l, i, k: (0, 0)),  # W_r1 (resident)
                pl.BlockSpec((1, hid_pad), lambda l, i, k: (0, 0)),        # b1   (resident)
                pl.BlockSpec((hid_pad, out_pad), lambda l, i, k: (0, 0)),  # W_l2 (resident)
                pl.BlockSpec((hid_pad, out_pad), lambda l, i, k: (0, 0)),  # W_r2 (resident)
                pl.BlockSpec((1, out_pad), lambda l, i, k: (0, 0)),        # b2   (resident)
            ],
            out_specs=[
                # hidden owned by layer 0; layer 1 pins it to block 0 (one extra writeback)
                pl.BlockSpec((tm, hid_pad), lambda l, i, k: (i * (1 - l), 0)),
                # out owned by layer 1; layer 0 pins it to block 0 and never writes it
                pl.BlockSpec((tm, out_pad), lambda l, i, k: (i * l, 0)),
            ],
            scratch_shapes=[
                pltpu.VMEM((tm, max(fin_pad, hid_pad)), jnp.float32),  # f32 accumulator
                pltpu.VMEM((n_pad, hid_pad), jnp.bfloat16),            # resident hidden
                pltpu.VMEM((tm, hid_pad), jnp.float32),                # f32 hidden block 0
            ],
        ),
        compiler_params=pltpu.CompilerParams(
            # row axis must stay serial: layer 2 of every row block reads the full
            # hidden matrix held in (per-core) VMEM scratch.
            dimension_semantics=("arbitrary", "arbitrary", "arbitrary"),
            vmem_limit_bytes=vmem_limit,
        ),
        cost_estimate=pl.CostEstimate(
            flops=flops, transcendentals=0, bytes_accessed=bytes_accessed),
    )(a, xp, deg_inv, wl1, wr1, b1p, wl2, wr2, b2p)

    return hidden_p[:n, :hid_c], out_p[:n, :out_c]


class GraphSAGE:
    """JAX/Pallas port of the PyTorch GraphSAGE module (2x SAGEConv, mean aggr)."""

    def __init__(self, in_c, hid_c, out_c, key):
        k = jax.random.split(key, 4)

        def glorot(rng, fan_in, fan_out):
            lim = (6.0 / (fan_in + fan_out)) ** 0.5
            return jax.random.uniform(rng, (fan_in, fan_out), jnp.float32, -lim, lim)

        # conv1: lin_l (with bias) applied to aggregated messages, lin_r (no bias) to root
        self.w_l1 = glorot(k[0], in_c, hid_c)
        self.w_r1 = glorot(k[1], in_c, hid_c)
        self.b1 = jnp.zeros((1, hid_c), jnp.float32)
        # conv2
        self.w_l2 = glorot(k[2], hid_c, out_c)
        self.w_r2 = glorot(k[3], hid_c, out_c)
        self.b2 = jnp.zeros((1, out_c), jnp.float32)
        self.hidden = None

    def __call__(self, x, edge_index):
        hidden, out = sage_forward(
            x, edge_index,
            self.w_l1, self.w_r1, self.b1,
            self.w_l2, self.w_r2, self.b2)
        self.hidden = hidden  # post-ReLU conv1 output (mirrors PyTorch's self.hidden)
        return out


# --------------------------------- main --------------------------------------
if __name__ == "__main__":
    key = jax.random.PRNGKey(0)
    k_x, k_e, k_p = jax.random.split(key, 3)

    num_nodes, in_c, hid_c, out_c = 16, 8, 32, 8
    num_edges = 48

    x = jax.random.normal(k_x, (num_nodes, in_c), jnp.float32)
    edge_index = jax.random.randint(k_e, (2, num_edges), 0, num_nodes, jnp.int32)

    model = GraphSAGE(in_c, hid_c, out_c, k_p)
    out = model(x, edge_index)
    jax.block_until_ready(out)
    jax.block_until_ready(model.hidden)

    assert out.shape == (num_nodes, out_c)
    assert model.hidden.shape == (num_nodes, hid_c)

    # pure-JAX f32 reference (loose tolerance: kernel streams A/X/W in bf16)
    adj = jnp.zeros((num_nodes, num_nodes), jnp.float32)
    adj = adj.at[edge_index[1], edge_index[0]].add(1.0)
    deg = adj.sum(axis=1, keepdims=True)
    a_ref = jnp.where(deg > 0, adj / jnp.maximum(deg, 1.0), 0.0)
    h_ref = jnp.maximum((a_ref @ x) @ model.w_l1 + x @ model.w_r1 + model.b1, 0.0)
    out_ref = (a_ref @ h_ref) @ model.w_l2 + h_ref @ model.w_r2 + model.b2

    assert bool(jnp.allclose(model.hidden, h_ref, rtol=1e-1, atol=1e-1))
    assert bool(jnp.allclose(out, out_ref, rtol=1.5e-1, atol=1.5e-1))
    print("KERNEL_OK")
</pallas_src>

<mosaic_0001>
module attributes {stable_mosaic.version = 11 : i64} {
  func.func @_fused_sage_kernel(%arg0: i32, %arg1: i32, %arg2: i32, %arg3: memref<128x128xbf16, #tpu.memory_space<vmem>>, %arg4: memref<128x128xbf16, #tpu.memory_space<vmem>>, %arg5: memref<128x1xf32, #tpu.memory_space<vmem>>, %arg6: memref<128x128xbf16, #tpu.memory_space<vmem>>, %arg7: memref<128x128xbf16, #tpu.memory_space<vmem>>, %arg8: memref<1x128xf32, #tpu.memory_space<vmem>>, %arg9: memref<128x128xbf16, #tpu.memory_space<vmem>>, %arg10: memref<128x128xbf16, #tpu.memory_space<vmem>>, %arg11: memref<1x128xf32, #tpu.memory_space<vmem>>, %arg12: memref<128x128xf32, #tpu.memory_space<vmem>>, %arg13: memref<128x128xf32, #tpu.memory_space<vmem>>, %arg14: memref<128x128xf32, #tpu.memory_space<vmem>>, %arg15: memref<128x128xbf16, #tpu.memory_space<vmem>>, %arg16: memref<128x128xf32, #tpu.memory_space<vmem>>) attributes {dimension_semantics = [#tpu.dimension_semantics<arbitrary>, #tpu.dimension_semantics<arbitrary>, #tpu.dimension_semantics<arbitrary>], iteration_bounds = array<i64: 2, 1, 1>, scalar_prefetch = 0 : i64, scratch_operands = 3 : i64, tpu.core_type = #tpu.core_type<tc>, window_params = [{transform_indices = @transform_0, window_bounds = array<i64: 128, 128>}, {pipeline_mode = #tpu.pipeline_mode<synchronous>, transform_indices = @transform_1, window_bounds = array<i64: 128, 128>}, {transform_indices = @transform_2, window_bounds = array<i64: 128, 1>}, {pipeline_mode = #tpu.pipeline_mode<synchronous>, transform_indices = @transform_3, window_bounds = array<i64: 128, 128>}, {pipeline_mode = #tpu.pipeline_mode<synchronous>, transform_indices = @transform_4, window_bounds = array<i64: 128, 128>}, {pipeline_mode = #tpu.pipeline_mode<synchronous>, transform_indices = @transform_5, window_bounds = array<i64: 1, 128>}, {pipeline_mode = #tpu.pipeline_mode<synchronous>, transform_indices = @transform_6, window_bounds = array<i64: 128, 128>}, {pipeline_mode = #tpu.pipeline_mode<synchronous>, transform_indices = @transform_7, window_bounds = array<i64: 128, 128>}, {pipeline_mode = #tpu.pipeline_mode<synchronous>, transform_indices = @transform_8, window_bounds = array<i64: 1, 128>}, {transform_indices = @transform_9, window_bounds = array<i64: 128, 128>}, {transform_indices = @transform_10, window_bounds = array<i64: 128, 128>}]} {
    %c0_i32 = arith.constant 0 : i32
    %0 = arith.cmpi eq, %arg2, %c0_i32 : i32
    %1 = arith.extui %0 : i1 to i32
    %c0_i32_0 = arith.constant 0 : i32
    %2 = arith.cmpi ne, %1, %c0_i32_0 : i32
    scf.if %2 {
      %cst = arith.constant 0.000000e+00 : f32
      %15 = vector.broadcast %cst : f32 to vector<128x128xf32>
      %c0_7 = arith.constant 0 : index
      %c0_8 = arith.constant 0 : index
      %16 = vector.load %arg14[%c0_7, %c0_8] : memref<128x128xf32, #tpu.memory_space<vmem>>, vector<128x128xf32>
      tpu.vector_store %arg14[%c0_7, %c0_8], %15 {strides = array<i32>} : memref<128x128xf32, #tpu.memory_space<vmem>>, vector<128x128xf32>,
    } else {
    }
    %c0 = arith.constant 0 : index
    %c0_1 = arith.constant 0 : index
    %3 = vector.load %arg3[%c0, %c0_1] : memref<128x128xbf16, #tpu.memory_space<vmem>>, vector<128x128xbf16>
    %c128_i32 = arith.constant 128 : i32
    %4 = arith.muli %arg2, %c128_i32 : i32
    %5 = tpu.assume_multiple %4, 128 : i32
    %c0_i32_2 = arith.constant 0 : i32
    %6 = arith.cmpi eq, %arg0, %c0_i32_2 : i32
    %7 = arith.extui %6 : i1 to i32
    %c0_i32_3 = arith.constant 0 : i32
    %8 = arith.cmpi ne, %7, %c0_i32_3 : i32
    scf.if %8 {
      %15 = arith.index_cast %5 : i32 to index
      %c0_7 = arith.constant 0 : index
      %16 = vector.load %arg4[%15, %c0_7] : memref<128x128xbf16, #tpu.memory_space<vmem>>, vector<128x128xbf16>
      %c0_8 = arith.constant 0 : index
      %c0_9 = arith.constant 0 : index
      %17 = vector.load %arg14[%c0_8, %c0_9] : memref<128x128xf32, #tpu.memory_space<vmem>>, vector<128x128xf32>
      %cst = arith.constant dense<0.000000e+00> : vector<128x128xf32>
      %18 = tpu.matmul %3, %16, %cst {dimension_numbers = #tpu.dot_dimension_numbers<[1], [0], [0], [1], [0, 0, 1, 1], [], []>} : vector<128x128xbf16>, vector<128x128xbf16>, vector<128x128xf32> -> vector<128x128xf32>
      %19 = arith.addf %17, %18 : vector<128x128xf32>
      %c0_10 = arith.constant 0 : index
      %c0_11 = arith.constant 0 : index
      %20 = vector.load %arg14[%c0_10, %c0_11] : memref<128x128xf32, #tpu.memory_space<vmem>>, vector<128x128xf32>
      tpu.vector_store %arg14[%c0_10, %c0_11], %19 {strides = array<i32>} : memref<128x128xf32, #tpu.memory_space<vmem>>, vector<128x128xf32>,
    } else {
    }
    %c1_i32 = arith.constant 1 : i32
    %9 = arith.cmpi eq, %arg0, %c1_i32 : i32
    %10 = arith.extui %9 : i1 to i32
    %c0_i32_4 = arith.constant 0 : i32
    %11 = arith.cmpi ne, %10, %c0_i32_4 : i32
    scf.if %11 {
      %15 = arith.index_cast %5 : i32 to index
      %c0_7 = arith.constant 0 : index
      %16 = vector.load %arg15[%15, %c0_7] : memref<128x128xbf16, #tpu.memory_space<vmem>>, vector<128x128xbf16>
      %c0_8 = arith.constant 0 : index
      %c0_9 = arith.constant 0 : index
      %17 = vector.load %arg14[%c0_8, %c0_9] : memref<128x128xf32, #tpu.memory_space<vmem>>, vector<128x128xf32>
      %cst = arith.constant dense<0.000000e+00> : vector<128x128xf32>
      %18 = tpu.matmul %3, %16, %cst {dimension_numbers = #tpu.dot_dimension_numbers<[1], [0], [0], [1], [0, 0, 1, 1], [], []>} : vector<128x128xbf16>, vector<128x128xbf16>, vector<128x128xf32> -> vector<128x128xf32>
      %19 = arith.addf %17, %18 : vector<128x128xf32>
      %c0_10 = arith.constant 0 : index
      %c0_11 = arith.constant 0 : index
      %20 = vector.load %arg14[%c0_10, %c0_11] : memref<128x128xf32, #tpu.memory_space<vmem>>, vector<128x128xf32>
      tpu.vector_store %arg14[%c0_10, %c0_11], %19 {strides = array<i32>} : memref<128x128xf32, #tpu.memory_space<vmem>>, vector<128x128xf32>,
    } else {
    }
    %c0_i32_5 = arith.constant 0 : i32
    %12 = arith.cmpi eq, %arg2, %c0_i32_5 : i32
    %13 = arith.extui %12 : i1 to i32
    %c0_i32_6 = arith.constant 0 : i32
    %14 = arith.cmpi ne, %13, %c0_i32_6 : i32
    scf.if %14 {
      %c128_i32_7 = arith.constant 128 : i32
      %15 = arith.muli %arg1, %c128_i32_7 : i32
      %16 = tpu.assume_multiple %15, 128 : i32
      %c0_8 = arith.constant 0 : index
      %c0_9 = arith.constant 0 : index
      %17 = vector.load %arg5[%c0_8, %c0_9] : memref<128x1xf32, #tpu.memory_space<vmem>>, vector<128x1xf32>
      %c0_i32_10 = arith.constant 0 : i32
      %18 = arith.cmpi eq, %arg0, %c0_i32_10 : i32
      %19 = arith.extui %18 : i1 to i32
      %c0_i32_11 = arith.constant 0 : i32
      %20 = arith.cmpi ne, %19, %c0_i32_11 : i32
      scf.if %20 {
        %c0_14 = arith.constant 0 : index
        %c0_15 = arith.constant 0 : index
        %24 = vector.load %arg14[%c0_14, %c0_15] : memref<128x128xf32, #tpu.memory_space<vmem>>, vector<128x128xf32>
        %25 = vector.broadcast %17 : vector<128x1xf32> to vector<128x128xf32>
        %26 = arith.mulf %24, %25 : vector<128x128xf32>
        %27 = arith.index_cast %16 : i32 to index
        %c0_16 = arith.constant 0 : index
        %28 = vector.load %arg4[%27, %c0_16] : memref<128x128xbf16, #tpu.memory_space<vmem>>, vector<128x128xbf16>
        %29 = arith.truncf %26 : vector<128x128xf32> to vector<128x128xbf16>
        %c0_17 = arith.constant 0 : index
        %c0_18 = arith.constant 0 : index
        %30 = vector.load %arg6[%c0_17, %c0_18] : memref<128x128xbf16, #tpu.memory_space<vmem>>, vector<128x128xbf16>
        %cst = arith.constant dense<0.000000e+00> : vector<128x128xf32>
        %31 = tpu.matmul %29, %30, %cst {dimension_numbers = #tpu.dot_dimension_numbers<[1], [0], [0], [1], [0, 0, 1, 1], [], []>} : vector<128x128xbf16>, vector<128x128xbf16>, vector<128x128xf32> -> vector<128x128xf32>
        %c0_19 = arith.constant 0 : index
        %c0_20 = arith.constant 0 : index
        %32 = vector.load %arg7[%c0_19, %c0_20] : memref<128x128xbf16, #tpu.memory_space<vmem>>, vector<128x128xbf16>
        %cst_21 = arith.constant dense<0.000000e+00> : vector<128x128xf32>
        %33 = tpu.matmul %28, %32, %cst_21 {dimension_numbers = #tpu.dot_dimension_numbers<[1], [0], [0], [1], [0, 0, 1, 1], [], []>} : vector<128x128xbf16>, vector<128x128xbf16>, vector<128x128xf32> -> vector<128x128xf32>
        %34 = arith.addf %31, %33 : vector<128x128xf32>
        %c0_22 = arith.constant 0 : index
        %c0_23 = arith.constant 0 : index
        %35 = vector.load %arg8[%c0_22, %c0_23] : memref<1x128xf32, #tpu.memory_space<vmem>>, vector<1x128xf32>
        %36 = vector.broadcast %35 : vector<1x128xf32> to vector<128x128xf32>
        %37 = arith.addf %34, %36 : vector<128x128xf32>
        %cst_24 = arith.constant 0.000000e+00 : f32
        %38 = vector.broadcast %cst_24 : f32 to vector<128x128xf32>
        %39 = arith.maximumf %37, %38 : vector<128x128xf32>
        %c0_25 = arith.constant 0 : index
        %c0_26 = arith.constant 0 : index
        %40 = vector.load %arg12[%c0_25, %c0_26] : memref<128x128xf32, #tpu.memory_space<vmem>>, vector<128x128xf32>
        tpu.vector_store %arg12[%c0_25, %c0_26], %39 {strides = array<i32>} : memref<128x128xf32, #tpu.memory_space<vmem>>, vector<128x128xf32>,
        %41 = arith.truncf %39 : vector<128x128xf32> to vector<128x128xbf16>
        %42 = arith.index_cast %16 : i32 to index
        %c0_27 = arith.constant 0 : index
        %43 = vector.load %arg15[%42, %c0_27] : memref<128x128xbf16, #tpu.memory_space<vmem>>, vector<128x128xbf16>
        tpu.vector_store %arg15[%42, %c0_27], %41 {strides = array<i32>} : memref<128x128xbf16, #tpu.memory_space<vmem>>, vector<128x128xbf16>,
        %c0_i32_28 = arith.constant 0 : i32
        %44 = arith.cmpi eq, %arg1, %c0_i32_28 : i32
        %45 = arith.extui %44 : i1 to i32
        %c0_i32_29 = arith.constant 0 : i32
        %46 = arith.cmpi ne, %45, %c0_i32_29 : i32
        scf.if %46 {
          %c0_30 = arith.constant 0 : index
          %c0_31 = arith.constant 0 : index
          %47 = vector.load %arg16[%c0_30, %c0_31] : memref<128x128xf32, #tpu.memory_space<vmem>>, vector<128x128xf32>
          tpu.vector_store %arg16[%c0_30, %c0_31], %39 {strides = array<i32>} : memref<128x128xf32, #tpu.memory_space<vmem>>, vector<128x128xf32>,
        } else {
        }
      } else {
      }
      %c1_i32_12 = arith.constant 1 : i32
      %21 = arith.cmpi eq, %arg0, %c1_i32_12 : i32
      %22 = arith.extui %21 : i1 to i32
      %c0_i32_13 = arith.constant 0 : i32
      %23 = arith.cmpi ne, %22, %c0_i32_13 : i32
      scf.if %23 {
        %c0_14 = arith.constant 0 : index
        %c0_15 = arith.constant 0 : index
        %24 = vector.load %arg14[%c0_14, %c0_15] : memref<128x128xf32, #tpu.memory_space<vmem>>, vector<128x128xf32>
        %25 = vector.broadcast %17 : vector<128x1xf32> to vector<128x128xf32>
        %26 = arith.mulf %24, %25 : vector<128x128xf32>
        %27 = arith.index_cast %16 : i32 to index
        %c0_16 = arith.constant 0 : index
        %28 = vector.load %arg15[%27, %c0_16] : memref<128x128xbf16, #tpu.memory_space<vmem>>, vector<128x128xbf16>
        %29 = arith.truncf %26 : vector<128x128xf32> to vector<128x128xbf16>
        %c0_17 = arith.constant 0 : index
        %c0_18 = arith.constant 0 : index
        %30 = vector.load %arg9[%c0_17, %c0_18] : memref<128x128xbf16, #tpu.memory_space<vmem>>, vector<128x128xbf16>
        %cst = arith.constant dense<0.000000e+00> : vector<128x128xf32>
        %31 = tpu.matmul %29, %30, %cst {dimension_numbers = #tpu.dot_dimension_numbers<[1], [0], [0], [1], [0, 0, 1, 1], [], []>} : vector<128x128xbf16>, vector<128x128xbf16>, vector<128x128xf32> -> vector<128x128xf32>
        %c0_19 = arith.constant 0 : index
        %c0_20 = arith.constant 0 : index
        %32 = vector.load %arg10[%c0_19, %c0_20] : memref<128x128xbf16, #tpu.memory_space<vmem>>, vector<128x128xbf16>
        %cst_21 = arith.constant dense<0.000000e+00> : vector<128x128xf32>
        %33 = tpu.matmul %28, %32, %cst_21 {dimension_numbers = #tpu.dot_dimension_numbers<[1], [0], [0], [1], [0, 0, 1, 1], [], []>} : vector<128x128xbf16>, vector<128x128xbf16>, vector<128x128xf32> -> vector<128x128xf32>
        %34 = arith.addf %31, %33 : vector<128x128xf32>
        %c0_22 = arith.constant 0 : index
        %c0_23 = arith.constant 0 : index
        %35 = vector.load %arg11[%c0_22, %c0_23] : memref<1x128xf32, #tpu.memory_space<vmem>>, vector<1x128xf32>
        %36 = vector.broadcast %35 : vector<1x128xf32> to vector<128x128xf32>
        %37 = arith.addf %34, %36 : vector<128x128xf32>
        %c0_24 = arith.constant 0 : index
        %c0_25 = arith.constant 0 : index
        %38 = vector.load %arg13[%c0_24, %c0_25] : memref<128x128xf32, #tpu.memory_space<vmem>>, vector<128x128xf32>
        tpu.vector_store %arg13[%c0_24, %c0_25], %37 {strides = array<i32>} : memref<128x128xf32, #tpu.memory_space<vmem>>, vector<128x128xf32>,
        %c0_26 = arith.constant 0 : index
        %c0_27 = arith.constant 0 : index
        %39 = vector.load %arg16[%c0_26, %c0_27] : memref<128x128xf32, #tpu.memory_space<vmem>>, vector<128x128xf32>
        %c0_28 = arith.constant 0 : index
        %c0_29 = arith.constant 0 : index
        %40 = vector.load %arg12[%c0_28, %c0_29] : memref<128x128xf32, #tpu.memory_space<vmem>>, vector<128x128xf32>
        tpu.vector_store %arg12[%c0_28, %c0_29], %39 {strides = array<i32>} : memref<128x128xf32, #tpu.memory_space<vmem>>, vector<128x128xf32>,
      } else {
      }
    } else {
    }
    return
  }
  func.func @transform_0(%arg0: i32, %arg1: i32, %arg2: i32) -> (i32, i32) {
    %c0_i32 = arith.constant 0 : i32
    return %arg1, %arg2 : i32, i32
  }
  func.func @transform_1(%arg0: i32, %arg1: i32, %arg2: i32) -> (i32, i32) {
    %c0_i32 = arith.constant 0 : i32
    %c0_i32_0 = arith.constant 0 : i32
    %c0_i32_1 = arith.constant 0 : i32
    return %c0_i32, %c0_i32_0 : i32, i32
  }
  func.func @transform_2(%arg0: i32, %arg1: i32, %arg2: i32) -> (i32, i32) {
    %c0_i32 = arith.constant 0 : i32
    %c0_i32_0 = arith.constant 0 : i32
    return %arg1, %c0_i32 : i32, i32
  }
  func.func @transform_3(%arg0: i32, %arg1: i32, %arg2: i32) -> (i32, i32) {
    %c0_i32 = arith.constant 0 : i32
    %c0_i32_0 = arith.constant 0 : i32
    %c0_i32_1 = arith.constant 0 : i32
    return %c0_i32, %c0_i32_0 : i32, i32
  }
  func.func @transform_4(%arg0: i32, %arg1: i32, %arg2: i32) -> (i32, i32) {
    %c0_i32 = arith.constant 0 : i32
    %c0_i32_0 = arith.constant 0 : i32
    %c0_i32_1 = arith.constant 0 : i32
    return %c0_i32, %c0_i32_0 : i32, i32
  }
  func.func @transform_5(%arg0: i32, %arg1: i32, %arg2: i32) -> (i32, i32) {
    %c0_i32 = arith.constant 0 : i32
    %c0_i32_0 = arith.constant 0 : i32
    %c0_i32_1 = arith.constant 0 : i32
    return %c0_i32, %c0_i32_0 : i32, i32
  }
  func.func @transform_6(%arg0: i32, %arg1: i32, %arg2: i32) -> (i32, i32) {
    %c0_i32 = arith.constant 0 : i32
    %c0_i32_0 = arith.constant 0 : i32
    %c0_i32_1 = arith.constant 0 : i32
    return %c0_i32, %c0_i32_0 : i32, i32
  }
  func.func @transform_7(%arg0: i32, %arg1: i32, %arg2: i32) -> (i32, i32) {
    %c0_i32 = arith.constant 0 : i32
    %c0_i32_0 = arith.constant 0 : i32
    %c0_i32_1 = arith.constant 0 : i32
    return %c0_i32, %c0_i32_0 : i32, i32
  }
  func.func @transform_8(%arg0: i32, %arg1: i32, %arg2: i32) -> (i32, i32) {
    %c0_i32 = arith.constant 0 : i32
    %c0_i32_0 = arith.constant 0 : i32
    %c0_i32_1 = arith.constant 0 : i32
    return %c0_i32, %c0_i32_0 : i32, i32
  }
  func.func @transform_9(%arg0: i32, %arg1: i32, %arg2: i32) -> (i32, i32) {
    %c1_i32 = arith.constant 1 : i32
    %0 = arith.subi %c1_i32, %arg0 : i32
    %1 = arith.muli %arg1, %0 : i32
    %c0_i32 = arith.constant 0 : i32
    %c0_i32_0 = arith.constant 0 : i32
    return %1, %c0_i32 : i32, i32
  }
  func.func @transform_10(%arg0: i32, %arg1: i32, %arg2: i32) -> (i32, i32) {
    %0 = arith.muli %arg1, %arg0 : i32
    %c0_i32 = arith.constant 0 : i32
    %c0_i32_0 = arith.constant 0 : i32
    return %0, %c0_i32 : i32, i32
  }
}

</mosaic_0001>

<llo_original>
// kernel: tpu_custom_call.1
$region0: #{tpu_custom_call.1}
  #allocation0 [shape = 'u32[]', space=smem, size = 0x4, offset = 0x4, fixed_abs, tag = 'smem constant byte address 0x4 - core index']
  #allocation1 [shape = 'u32[144,128]{1,0:T(1,128)}', space=vmem, size = 0x12000, scoped, tag = 'internal scratch']
  #allocation2 [shape = 'f32[128,128]{1,0:T(8,128)}', space=vmem, size = 0x10000, scoped, tag = 'scratch operand']
  #allocation3 [shape = 'bf16[128,128]{1,0:T(8,128)(2,1)}', space=vmem, size = 0x8000, scoped, tag = 'scratch operand']
  #allocation4 [shape = 'f32[128,128]{1,0:T(8,128)}', space=vmem, size = 0x10000, scoped, tag = 'scratch operand']
  %s0 = inlined_call_operand.vmem [shape: bf16[128,128], index: 0, kind: input, shape index: {}]
  %s1 = inlined_call_operand.vmem [shape: bf16[128,128], index: 1, kind: input, shape index: {}]
  %s2 = inlined_call_operand.vmem [shape: f32[128,1], index: 2, kind: input, shape index: {}]
  %s3 = inlined_call_operand.hbm [shape: bf16[128,128], index: 3, kind: input, shape index: {}]
  %s4 = inlined_call_operand.hbm [shape: bf16[128,128], index: 4, kind: input, shape index: {}]
  %s5 = inlined_call_operand.vmem [shape: f32[1,128], index: 5, kind: input, shape index: {}]
  %s6 = inlined_call_operand.hbm [shape: bf16[128,128], index: 6, kind: input, shape index: {}]
  %s7 = inlined_call_operand.hbm [shape: bf16[128,128], index: 7, kind: input, shape index: {}]
  %s8 = inlined_call_operand.vmem [shape: f32[1,128], index: 8, kind: input, shape index: {}]
  %s9 = inlined_call_operand.hbm [shape: f32[128,128], index: 9, kind: output, shape index: {0}]
  %s10 = inlined_call_operand.hbm [shape: f32[128,128], index: 10, kind: output, shape index: {1}]
  %11 = xla_tuple %s9, %s10
  %s12 = sld [smem:[#allocation0]]
  $region121: #{tpu_custom_call.1} parent=0
    _
  %s14 = ssub.s32 1, %s12
  %s15 = scalar_select 0, %s14, %s12
  $region1: #{tpu_custom_call.1} parent=0
    #allocation5 [shape = 'u8[32768]{0}', space=vmem, size = 0x8000, scoped, tag = 'input window, operand 3, single buffered']
    #allocation6 [shape = 's32[2]{0}', space=sflag, size = 0x8, scoped, tag = 'scoped memory for tpu_custom_call.1']
    #allocation7 [shape = 's32[2]{0}', space=sflag, size = 0x8, scoped, tag = 'scoped memory for tpu_custom_call.1']
    #allocation8 [shape = 'u8[32768]{0}', space=vmem, size = 0x8000, scoped, tag = 'input window, operand 4, single buffered']
    #allocation9 [shape = 's32[1]{0}', space=sflag, size = 0x4, scoped, tag = 'scoped memory for tpu_custom_call.1']
    #allocation10 [shape = 'u8[32768]{0}', space=vmem, size = 0x8000, scoped, tag = 'input window, operand 6, single buffered']
    #allocation11 [shape = 'u8[32768]{0}', space=vmem, size = 0x8000, scoped, tag = 'input window, operand 7, single buffered']
    #allocation12 [shape = 's32[1]{0}', space=sflag, size = 0x4, scoped, tag = 'scoped memory for tpu_custom_call.1']
    #allocation13 [shape = 'u8[131072]{0}', space=vmem, size = 0x20000, scoped, tag = 'output window, operand 0']
    #allocation14 [shape = 'u8[131072]{0}', space=vmem, size = 0x20000, scoped, tag = 'output window, operand 1']
    #allocation15 [shape = 's32[2]{0}', space=sflag, size = 0x8, scoped, tag = 'scoped memory for tpu_custom_call.1']
    %16 = vsyncpa [#allocation6], 0
    %17 = vsyncpa [#allocation9], 0
    %18 = vsyncpa [#allocation12], 0
    %19 = vsyncpa [#allocation7], 0
    %s20 = scalar_lea.sflag [#allocation7], 1
    %21 = vsyncpa %s20, 0
    %22 = vsyncpa [#allocation15], 0
    %s23 = scalar_lea.sflag [#allocation15], 1
    %24 = vsyncpa %s23, 0
    loop: start=0, step=1, limit=4
    $region2: #{tpu_custom_call.1} parent=1 // loop_pre_header
      _
    $region3: #{tpu_custom_call.1} parent=1 // loop_header
      %s26 = sphi 0, %s30
      %p27 = scmp.ge.s32.totalorder %s26, 4
      %s33 = sphi 0, %s52
      %s34 = sphi 0, %s48
      %s35 = sphi 0, %s44
      %s36 = sphi 0, %s33
      %s37 = sphi 0, %s34
      %s38 = sphi 0, %s35
      %s39 = sphi 0, %s36
      %s40 = sphi 0, %s37
      %s41 = sphi 0, %s38
      %s57 = sphi 0, %s59
      %s60 = sphi 0, %s57
      %s61 = sphi 0, %s60
      %s77 = sphi 0, %s61
      %s81 = sphi 0, %s81
      %s83 = sphi 0, %s81
      %s84 = sphi 0, %s83
      %s98 = sphi 0, %s84
      %s104 = sphi 0, %s106
      %s107 = sphi 0, %s104
      %s108 = sphi 0, %s107
      %s124 = sphi 0, %s108
      %s128 = sphi 0, %s128
      %s130 = sphi 0, %s128
      %s131 = sphi 0, %s130
      %s145 = sphi 0, %s131
      %s149 = sphi 0, %s149
      %s151 = sphi 0, %s149
      %s152 = sphi 0, %s151
      %s166 = sphi 0, %s152
      %s170 = sphi 0, %s170
      %s172 = sphi 0, %s170
      %s173 = sphi 0, %s172
      %s187 = sphi 0, %s173
      %s191 = sphi 0, %s191
      %s193 = sphi 0, %s191
      %s194 = sphi 0, %s193
      %s208 = sphi 0, %s194
      %s212 = sphi 0, %s212
      %s214 = sphi 0, %s212
      %s215 = sphi 0, %s214
      %s229 = sphi 0, %s215
      %s233 = sphi 0, %s233
      %s235 = sphi 0, %s233
      %s236 = sphi 0, %s235
      %s250 = sphi 0, %s236
      %s260 = sphi 0, %s262
      %s263 = sphi 0, %s260
      %s264 = sphi 0, %s263
      %s280 = sphi 0, %s264
      %s288 = sphi 0, %s290
      %s291 = sphi 0, %s288
      %s292 = sphi 0, %s291
      %s308 = sphi 0, %s292
    $region4: #{tpu_custom_call.1} parent=1 // loop_header_branch
      %29 = sbr.rel (%p27) target = $region8
    $region5: #{tpu_custom_call.1} parent=1 // loop_body
      %s31 = ssub.s32 %s26, 1
      %s32 = ssub.s32 %s26, 2
      %s42 = sadd.s32 1, %s35
      %p43 = scmp.ge.s32.totalorder %s42, 1
      %s44 = scalar_select %p43, 0, %s42
      %s45 = sadd.s32 1, %s34
      %s46 = scalar_select %p43, %s45, %s34
      %p47 = scmp.ge.s32.totalorder %s46, 1
      %s48 = scalar_select %p47, 0, %s46
      %s49 = sadd.s32 1, %s33
      %s50 = scalar_select %p47, %s49, %s33
      %p51 = scmp.ge.s32.totalorder %s50, 2
      %s52 = scalar_select %p51, 0, %s50
      %s53 = ssub.s32 %s34, %s48
      %s54 = ssub.s32 %s35, %s44
      %s55 = sor.u32 %s53, %s54
      %p56 = scmp.eq.s32.totalorder %s55, 0
      %s58 = sadd.s32 %s57, 1
      %s59 = scalar_select %p56, %s57, %s58
      %p62 = pneg %p56
      %p63 = scmp.eq.s32.totalorder %s26, 1
      %p64 = por %p62, %p63
      %p65 = scmp.ne.s32.totalorder %s57, %s60
      %p66 = scmp.eq.s32.totalorder %s26, 0
      %p67 = por %p65, %p66
      %p68 = scmp.ne.s32.totalorder %s57, %s60
      %p69 = scmp.eq.s32.totalorder %s31, 1
      %p70 = por %p68, %p69
      %p71 = scmp.ne.s32.totalorder %s60, %s61
      %p72 = scmp.eq.s32.totalorder %s31, 0
      %p73 = por %p71, %p72
      %p74 = scmp.ne.s32.totalorder %s60, %s61
      %p75 = scmp.eq.s32.totalorder %s32, 1
      %p76 = por %p74, %p75
      %p78 = scmp.ne.s32.totalorder %s61, %s77
      %p79 = scmp.eq.s32.totalorder %s32, 0
      %p80 = por %p78, %p79
      %s82 = sadd.s32 %s81, 1
      %p85 = scmp.eq.s32.totalorder %s26, 1
      %p86 = scmp.ne.s32.totalorder %s81, %s83
      %p87 = scmp.eq.s32.totalorder %s26, 0
      %p88 = por %p86, %p87
      %p89 = scmp.ne.s32.totalorder %s81, %s83
      %p90 = scmp.eq.s32.totalorder %s31, 1
      %p91 = por %p89, %p90
      %p92 = scmp.ne.s32.totalorder %s83, %s84
      %p93 = scmp.eq.s32.totalorder %s31, 0
      %p94 = por %p92, %p93
      %p95 = scmp.ne.s32.totalorder %s83, %s84
      %p96 = scmp.eq.s32.totalorder %s32, 1
      %p97 = por %p95, %p96
      %p99 = scmp.ne.s32.totalorder %s84, %s98
      %p100 = scmp.eq.s32.totalorder %s32, 0
      %p101 = por %p99, %p100
      %s102 = ssub.s32 %s34, %s48
      %p103 = scmp.eq.s32.totalorder %s102, 0
      %s105 = sadd.s32 %s104, 1
      %s106 = scalar_select %p103, %s104, %s105
      %p109 = pneg %p103
      %p110 = scmp.eq.s32.totalorder %s26, 1
      %p111 = por %p109, %p110
      %p112 = scmp.ne.s32.totalorder %s104, %s107
      %p113 = scmp.eq.s32.totalorder %s26, 0
      %p114 = por %p112, %p113
      %p115 = scmp.ne.s32.totalorder %s104, %s107
      %p116 = scmp.eq.s32.totalorder %s31, 1
      %p117 = por %p115, %p116
      %p118 = scmp.ne.s32.totalorder %s107, %s108
      %p119 = scmp.eq.s32.totalorder %s31, 0
      %p120 = por %p118, %p119
      %p121 = scmp.ne.s32.totalorder %s107, %s108
      %p122 = scmp.eq.s32.totalorder %s32, 1
      %p123 = por %p121, %p122
      %p125 = scmp.ne.s32.totalorder %s108, %s124
      %p126 = scmp.eq.s32.totalorder %s32, 0
      %p127 = por %p125, %p126
      %s129 = sadd.s32 %s128, 1
      %p132 = scmp.eq.s32.totalorder %s26, 1
      %p133 = scmp.ne.s32.totalorder %s128, %s130
      %p134 = scmp.eq.s32.totalorder %s26, 0
      %p135 = por %p133, %p134
      %p136 = scmp.ne.s32.totalorder %s128, %s130
      %p137 = scmp.eq.s32.totalorder %s31, 1
      %p138 = por %p136, %p137
      %p139 = scmp.ne.s32.totalorder %s130, %s131
      %p140 = scmp.eq.s32.totalorder %s31, 0
      %p141 = por %p139, %p140
      %p142 = scmp.ne.s32.totalorder %s130, %s131
      %p143 = scmp.eq.s32.totalorder %s32, 1
      %p144 = por %p142, %p143
      %p146 = scmp.ne.s32.totalorder %s131, %s145
      %p147 = scmp.eq.s32.totalorder %s32, 0
      %p148 = por %p146, %p147
      %s150 = sadd.s32 %s149, 1
      %p153 = scmp.eq.s32.totalorder %s26, 1
      %p154 = scmp.ne.s32.totalorder %s149, %s151
      %p155 = scmp.eq.s32.totalorder %s26, 0
      %p156 = por %p154, %p155
      %p157 = scmp.ne.s32.totalorder %s149, %s151
      %p158 = scmp.eq.s32.totalorder %s31, 1
      %p159 = por %p157, %p158
      %p160 = scmp.ne.s32.totalorder %s151, %s152
      %p161 = scmp.eq.s32.totalorder %s31, 0
      %p162 = por %p160, %p161
      %p163 = scmp.ne.s32.totalorder %s151, %s152
      %p164 = scmp.eq.s32.totalorder %s32, 1
      %p165 = por %p163, %p164
      %p167 = scmp.ne.s32.totalorder %s152, %s166
      %p168 = scmp.eq.s32.totalorder %s32, 0
      %p169 = por %p167, %p168
      %s171 = sadd.s32 %s170, 1
      %p174 = scmp.eq.s32.totalorder %s26, 1
      %p175 = scmp.ne.s32.totalorder %s170, %s172
      %p176 = scmp.eq.s32.totalorder %s26, 0
      %p177 = por %p175, %p176
      %p178 = scmp.ne.s32.totalorder %s170, %s172
      %p179 = scmp.eq.s32.totalorder %s31, 1
      %p180 = por %p178, %p179
      %p181 = scmp.ne.s32.totalorder %s172, %s173
      %p182 = scmp.eq.s32.totalorder %s31, 0
      %p183 = por %p181, %p182
      %p184 = scmp.ne.s32.totalorder %s172, %s173
      %p185 = scmp.eq.s32.totalorder %s32, 1
      %p186 = por %p184, %p185
      %p188 = scmp.ne.s32.totalorder %s173, %s187
      %p189 = scmp.eq.s32.totalorder %s32, 0
      %p190 = por %p188, %p189
      %s192 = sadd.s32 %s191, 1
      %p195 = scmp.eq.s32.totalorder %s26, 1
      %p196 = scmp.ne.s32.totalorder %s191, %s193
      %p197 = scmp.eq.s32.totalorder %s26, 0
      %p198 = por %p196, %p197
      %p199 = scmp.ne.s32.totalorder %s191, %s193
      %p200 = scmp.eq.s32.totalorder %s31, 1
      %p201 = por %p199, %p200
      %p202 = scmp.ne.s32.totalorder %s193, %s194
      %p203 = scmp.eq.s32.totalorder %s31, 0
      %p204 = por %p202, %p203
      %p205 = scmp.ne.s32.totalorder %s193, %s194
      %p206 = scmp.eq.s32.totalorder %s32, 1
      %p207 = por %p205, %p206
      %p209 = scmp.ne.s32.totalorder %s194, %s208
      %p210 = scmp.eq.s32.totalorder %s32, 0
      %p211 = por %p209, %p210
      %s213 = sadd.s32 %s212, 1
      %p216 = scmp.eq.s32.totalorder %s26, 1
      %p217 = scmp.ne.s32.totalorder %s212, %s214
      %p218 = scmp.eq.s32.totalorder %s26, 0
      %p219 = por %p217, %p218
      %p220 = scmp.ne.s32.totalorder %s212, %s214
      %p221 = scmp.eq.s32.totalorder %s31, 1
      %p222 = por %p220, %p221
      %p223 = scmp.ne.s32.totalorder %s214, %s215
      %p224 = scmp.eq.s32.totalorder %s31, 0
      %p225 = por %p223, %p224
      %p226 = scmp.ne.s32.totalorder %s214, %s215
      %p227 = scmp.eq.s32.totalorder %s32, 1
      %p228 = por %p226, %p227
      %p230 = scmp.ne.s32.totalorder %s215, %s229
      %p231 = scmp.eq.s32.totalorder %s32, 0
      %p232 = por %p230, %p231
      %s234 = sadd.s32 %s233, 1
      %p237 = scmp.eq.s32.totalorder %s26, 1
      %p238 = scmp.ne.s32.totalorder %s233, %s235
      %p239 = scmp.eq.s32.totalorder %s26, 0
      %p240 = por %p238, %p239
      %p241 = scmp.ne.s32.totalorder %s233, %s235
      %p242 = scmp.eq.s32.totalorder %s31, 1
      %p243 = por %p241, %p242
      %p244 = scmp.ne.s32.totalorder %s235, %s236
      %p245 = scmp.eq.s32.totalorder %s31, 0
      %p246 = por %p244, %p245
      %p247 = scmp.ne.s32.totalorder %s235, %s236
      %p248 = scmp.eq.s32.totalorder %s32, 1
      %p249 = por %p247, %p248
      %p251 = scmp.ne.s32.totalorder %s236, %s250
      %p252 = scmp.eq.s32.totalorder %s32, 0
      %p253 = por %p251, %p252
      %s254 = ssub.s32 1, %s33
      %s255 = smul.u32 %s34, %s254
      %s256 = ssub.s32 1, %s52
      %s257 = smul.u32 %s48, %s256
      %s258 = ssub.s32 %s255, %s257
      %p259 = scmp.eq.s32.totalorder %s258, 0
      %s261 = sadd.s32 %s260, 1
      %s262 = scalar_select %p259, %s260, %s261
      %p265 = pneg %p259
      %p266 = scmp.eq.s32.totalorder %s26, 1
      %p267 = por %p265, %p266
      %p268 = scmp.ne.s32.totalorder %s260, %s263
      %p269 = scmp.eq.s32.totalorder %s26, 0
      %p270 = por %p268, %p269
      %p271 = scmp.ne.s32.totalorder %s260, %s263
      %p272 = scmp.eq.s32.totalorder %s31, 1
      %p273 = por %p271, %p272
      %p274 = scmp.ne.s32.totalorder %s263, %s264
      %p275 = scmp.eq.s32.totalorder %s31, 0
      %p276 = por %p274, %p275
      %p277 = scmp.ne.s32.totalorder %s263, %s264
      %p278 = scmp.eq.s32.totalorder %s32, 1
      %p279 = por %p277, %p278
      %p281 = scmp.ne.s32.totalorder %s264, %s280
      %p282 = scmp.eq.s32.totalorder %s32, 0
      %p283 = por %p281, %p282
      %s284 = smul.u32 %s34, %s33
      %s285 = smul.u32 %s48, %s52
      %s286 = ssub.s32 %s284, %s285
      %p287 = scmp.eq.s32.totalorder %s286, 0
      %s289 = sadd.s32 %s288, 1
      %s290 = scalar_select %p287, %s288, %s289
      %p293 = pneg %p287
      %p294 = scmp.eq.s32.totalorder %s26, 1
      %p295 = por %p293, %p294
      %p296 = scmp.ne.s32.totalorder %s288, %s291
      %p297 = scmp.eq.s32.totalorder %s26, 0
      %p298 = por %p296, %p297
      %p299 = scmp.ne.s32.totalorder %s288, %s291
      %p300 = scmp.eq.s32.totalorder %s31, 1
      %p301 = por %p299, %p300
      %p302 = scmp.ne.s32.totalorder %s291, %s292
      %p303 = scmp.eq.s32.totalorder %s31, 0
      %p304 = por %p302, %p303
      %p305 = scmp.ne.s32.totalorder %s291, %s292
      %p306 = scmp.eq.s32.totalorder %s32, 1
      %p307 = por %p305, %p306
      %p309 = scmp.ne.s32.totalorder %s292, %s308
      %p310 = scmp.eq.s32.totalorder %s32, 0
      %p311 = por %p309, %p310
      %p312 = scmp.le.s32.totalorder 1, %s26
      %p313 = scmp.lt.s32.totalorder %s26, 3
      %p314 = pnand %p312, %p313
      %p315 = pneg %p314
      // Predicated region
      $region9: #{tpu_custom_call.1} parent=5 // pred_check
        _
      $region10: #{tpu_custom_call.1} parent=5 // pred_check_branch
        %317 = sbr.rel (%p314) target = $region12
      $region11: #{tpu_custom_call.1} parent=5 // pred_region
        %s318 = ssub.s32 %s26, 1
        // Predicated region
        $region13: #{tpu_custom_call.1} parent=11 // pred_check
          %p319 = pneg %p73
        $region14: #{tpu_custom_call.1} parent=11 // pred_check_branch
          %321 = sbr.rel (%p319) target = $region16
        $region15: #{tpu_custom_call.1} parent=11 // pred_region
          %s322 = smul.u32 16, %s37
          %p323 = scmp.lt.s32.totalorder %s322, 15
          %s324 = scalar_select %p323, %s322, 15
          %p325 = scmp.lt.s32.totalorder %s38, 0
          %s326 = scalar_select %p325, %s38, 0
          %s327 = sadd.s32 %s326, %s324
          %s328 = smul.addr %s327, 4
          %s329 = scalar_lea.vmem %s0, %s328
          %s330 = smul.u32 16, %s37
        $region16: #{tpu_custom_call.1} parent=11 // pred_fallthru
          _
        // Predicated region
        $region17: #{tpu_custom_call.1} parent=11 // pred_check
          %p331 = pneg %p94
        $region18: #{tpu_custom_call.1} parent=11 // pred_check_branch
          %333 = sbr.rel (%p331) target = $region20
        $region19: #{tpu_custom_call.1} parent=11 // pred_region
          _
        $region20: #{tpu_custom_call.1} parent=11 // pred_fallthru
          _
        // Predicated region
        $region21: #{tpu_custom_call.1} parent=11 // pred_check
          %p334 = pneg %p120
        $region22: #{tpu_custom_call.1} parent=11 // pred_check_branch
          %336 = sbr.rel (%p334) target = $region24
        $region23: #{tpu_custom_call.1} parent=11 // pred_region
          %s337 = smul.u32 16, %s37
          %p338 = scmp.lt.s32.totalorder %s337, 15
          %s339 = scalar_select %p338, %s337, 15
          %s340 = smul.addr %s339, 8
          %s341 = scalar_lea.vmem %s2, %s340
          %s342 = smul.u32 16, %s37
        $region24: #{tpu_custom_call.1} parent=11 // pred_fallthru
          _
        // Predicated region
        $region25: #{tpu_custom_call.1} parent=11 // pred_check
          %p343 = pneg %p141
        $region26: #{tpu_custom_call.1} parent=11 // pred_check_branch
          %345 = sbr.rel (%p343) target = $region28
        $region27: #{tpu_custom_call.1} parent=11 // pred_region
          %s347 = ssub.s32 1024, 1024
          %348 = vsyncadd [#allocation6], %s347
          %s349 = sshll.u32 [#allocation5], 4
          %s350 = int_to_ptr.vmem [resolvable:$true] %s349
          %355 = dma.hbm_to_vmem [thread:$0]  %s3, 1024, %s350, [#allocation6], 64, 64, 4
        $region28: #{tpu_custom_call.1} parent=11 // pred_fallthru
          _
        // Predicated region
        $region29: #{tpu_custom_call.1} parent=11 // pred_check
          %p356 = pneg %p162
        $region30: #{tpu_custom_call.1} parent=11 // pred_check_branch
          %358 = sbr.rel (%p356) target = $region32
        $region31: #{tpu_custom_call.1} parent=11 // pred_region
          %s360 = ssub.s32 1024, 1024
          %361 = vsyncadd [#allocation9], %s360
          %s362 = sshll.u32 [#allocation8], 4
          %s363 = int_to_ptr.vmem [resolvable:$true] %s362
          %368 = dma.hbm_to_vmem [thread:$0]  %s4, 1024, %s363, [#allocation9], 64, 64, 4
        $region32: #{tpu_custom_call.1} parent=11 // pred_fallthru
          _
        // Predicated region
        $region33: #{tpu_custom_call.1} parent=11 // pred_check
          %p369 = pneg %p183
        $region34: #{tpu_custom_call.1} parent=11 // pred_check_branch
          %371 = sbr.rel (%p369) target = $region36
        $region35: #{tpu_custom_call.1} parent=11 // pred_region
          _
        $region36: #{tpu_custom_call.1} parent=11 // pred_fallthru
          _
        // Predicated region
        $region37: #{tpu_custom_call.1} parent=11 // pred_check
          %p372 = pneg %p204
        $region38: #{tpu_custom_call.1} parent=11 // pred_check_branch
          %374 = sbr.rel (%p372) target = $region40
        $region39: #{tpu_custom_call.1} parent=11 // pred_region
          %s376 = ssub.s32 1024, 1024
          %377 = vsyncadd [#allocation9], %s376
          %s378 = sshll.u32 [#allocation10], 4
          %s379 = int_to_ptr.vmem [resolvable:$true] %s378
          %384 = dma.hbm_to_vmem [thread:$0]  %s6, 1024, %s379, [#allocation9], 64, 64, 4
        $region40: #{tpu_custom_call.1} parent=11 // pred_fallthru
          _
        // Predicated region
        $region41: #{tpu_custom_call.1} parent=11 // pred_check
          %p385 = pneg %p225
        $region42: #{tpu_custom_call.1} parent=11 // pred_check_branch
          %387 = sbr.rel (%p385) target = $region44
        $region43: #{tpu_custom_call.1} parent=11 // pred_region
          %s389 = ssub.s32 1024, 1024
          %390 = vsyncadd [#allocation12], %s389
          %s391 = sshll.u32 [#allocation11], 4
          %s392 = int_to_ptr.vmem [resolvable:$true] %s391
          %397 = dma.hbm_to_vmem [thread:$0]  %s7, 1024, %s392, [#allocation12], 64, 64, 4
        $region44: #{tpu_custom_call.1} parent=11 // pred_fallthru
          _
        // Predicated region
        $region45: #{tpu_custom_call.1} parent=11 // pred_check
          %p398 = pneg %p246
        $region46: #{tpu_custom_call.1} parent=11 // pred_check_branch
          %400 = sbr.rel (%p398) target = $region48
        $region47: #{tpu_custom_call.1} parent=11 // pred_region
          _
        $region48: #{tpu_custom_call.1} parent=11 // pred_fallthru
          _
      $region12: #{tpu_custom_call.1} parent=5 // pred_fallthru
        _
      %p401 = scmp.lt.s32.totalorder %s26, 2
      // Predicated region
      $region49: #{tpu_custom_call.1} parent=5 // pred_check
        %p402 = pneg %p401
      $region50: #{tpu_custom_call.1} parent=5 // pred_check_branch
        %404 = sbr.rel (%p402) target = $region52
      $region51: #{tpu_custom_call.1} parent=5 // pred_region
        _
      $region52: #{tpu_custom_call.1} parent=5 // pred_fallthru
        _
      %p405 = scmp.le.s32.totalorder 1, %s26
      %p406 = scmp.lt.s32.totalorder %s26, 3
      %p407 = pnand %p405, %p406
      %p408 = pneg %p407
      // Predicated region
      $region53: #{tpu_custom_call.1} parent=5 // pred_check
        _
      $region54: #{tpu_custom_call.1} parent=5 // pred_check_branch
        %410 = sbr.rel (%p407) target = $region56
      $region55: #{tpu_custom_call.1} parent=5 // pred_region
        %s411 = ssub.s32 %s26, 1
        // Predicated region
        $region57: #{tpu_custom_call.1} parent=55 // pred_check
          %p412 = pneg %p141
        $region58: #{tpu_custom_call.1} parent=55 // pred_check_branch
          %414 = sbr.rel (%p412) target = $region60
        $region59: #{tpu_custom_call.1} parent=55 // pred_region
          %415 = dma.done [#allocation6], 1024
        $region60: #{tpu_custom_call.1} parent=55 // pred_fallthru
          _
        // Predicated region
        $region61: #{tpu_custom_call.1} parent=55 // pred_check
          %p416 = pneg %p162
        $region62: #{tpu_custom_call.1} parent=55 // pred_check_branch
          %418 = sbr.rel (%p416) target = $region64
        $region63: #{tpu_custom_call.1} parent=55 // pred_region
          %419 = dma.done [#allocation9], 1024
        $region64: #{tpu_custom_call.1} parent=55 // pred_fallthru
          _
        // Predicated region
        $region65: #{tpu_custom_call.1} parent=55 // pred_check
          %p420 = pneg %p204
        $region66: #{tpu_custom_call.1} parent=55 // pred_check_branch
          %422 = sbr.rel (%p420) target = $region68
        $region67: #{tpu_custom_call.1} parent=55 // pred_region
          %423 = dma.done [#allocation9], 1024
        $region68: #{tpu_custom_call.1} parent=55 // pred_fallthru
          _
        // Predicated region
        $region69: #{tpu_custom_call.1} parent=55 // pred_check
          %p424 = pneg %p225
        $region70: #{tpu_custom_call.1} parent=55 // pred_check_branch
          %426 = sbr.rel (%p424) target = $region72
        $region71: #{tpu_custom_call.1} parent=55 // pred_region
          %427 = dma.done [#allocation12], 1024
        $region72: #{tpu_custom_call.1} parent=55 // pred_fallthru
          _
        %s428 = smul.u32 16, %s37
        %p429 = scmp.lt.s32.totalorder %s428, 15
        %s430 = scalar_select %p429, %s428, 15
        %p431 = scmp.lt.s32.totalorder %s38, 0
        %s432 = scalar_select %p431, %s38, 0
        %s433 = sadd.s32 %s432, %s430
        %s434 = smul.addr %s433, 4
        %s435 = scalar_lea.vmem %s0, %s434
        %p436 = pneg %p73
        %p437 = pneg %p70
        %p438 = pneg %p94
        %p439 = pneg %p91
        %s440 = smul.u32 16, %s37
        %p441 = scmp.lt.s32.totalorder %s440, 15
        %s442 = scalar_select %p441, %s440, 15
        %s443 = smul.addr %s442, 8
        %s444 = scalar_lea.vmem %s2, %s443
        %p445 = pneg %p120
        %p446 = pneg %p117
        %p447 = pneg %p141
        %p448 = pneg %p138
        %p449 = pneg %p162
        %p450 = pneg %p159
        %p451 = pneg %p183
        %p452 = pneg %p180
        %p453 = pneg %p204
        %p454 = pneg %p201
        %p455 = pneg %p225
        %p456 = pneg %p222
        %p457 = pneg %p246
        %p458 = pneg %p243
        %p459 = pneg %p276
        %p460 = pneg %p273
        %s461 = sand.u32 %s263, 1
        %s462 = scalar_lea.sflag [#allocation7], %s461
        %s463 = sand.u32 %s263, 1
        %s464 = smul.addr %s463, 128
        %s465 = scalar_lea.vmem [#allocation13], %s464
        %p466 = pneg %p304
        %p467 = pneg %p301
        %s468 = sand.u32 %s291, 1
        %s469 = scalar_lea.sflag [#allocation15], %s468
        %s470 = sand.u32 %s291, 1
        %s471 = smul.addr %s470, 128
        %s472 = scalar_lea.vmem [#allocation14], %s471
        %s473 = smul.u32 16, %s37
        %p474 = scmp.lt.s32.totalorder %s473, 15
        %s475 = scalar_select %p474, %s473, 15
        %p476 = scmp.lt.s32.totalorder %s38, 0
        %s477 = scalar_select %p476, %s38, 0
        %s478 = sadd.s32 %s477, %s475
        %s479 = smul.addr %s478, 4
        %s480 = scalar_lea.vmem %s0, %s479
        %s481 = smul.u32 16, %s37
        %s482 = smul.u32 16, %s37
        %p483 = scmp.lt.s32.totalorder %s482, 15
        %s484 = scalar_select %p483, %s482, 15
        %s485 = smul.addr %s484, 8
        %s486 = scalar_lea.vmem %s2, %s485
        %s487 = smul.u32 16, %s37
        %s488 = ssub.s32 1, %s36
        %s489 = smul.u32 %s37, %s488
        %s490 = smul.u32 16, %s489
        %s491 = smul.u32 %s37, %s36
        %s492 = smul.u32 16, %s491
        %p494 = scmp.eq.s32.totalorder %s38, 0
        // Predicated region
        $region73: #{tpu_custom_call.1} parent=55 // pred_check
          %p495 = pneg %p494
        $region74: #{tpu_custom_call.1} parent=55 // pred_check_branch
          %497 = sbr.rel (%p495) target = $region76
        $region75: #{tpu_custom_call.1} parent=55 // pred_region
          %498 = vst [vmem:[#allocation2] sm:$0xff] 0.0
          %499 = vst [vmem:[#allocation2 + $0x8] sm:$0xff] 0.0
          %500 = vst [vmem:[#allocation2 + $0x10] sm:$0xff] 0.0
          %501 = vst [vmem:[#allocation2 + $0x18] sm:$0xff] 0.0
          %502 = vst [vmem:[#allocation2 + $0x20] sm:$0xff] 0.0
          %503 = vst [vmem:[#allocation2 + $0x28] sm:$0xff] 0.0
          %504 = vst [vmem:[#allocation2 + $0x30] sm:$0xff] 0.0
          %505 = vst [vmem:[#allocation2 + $0x38] sm:$0xff] 0.0
          %506 = vst [vmem:[#allocation2 + $0x40] sm:$0xff] 0.0
          %507 = vst [vmem:[#allocation2 + $0x48] sm:$0xff] 0.0
          %508 = vst [vmem:[#allocation2 + $0x50] sm:$0xff] 0.0
          %509 = vst [vmem:[#allocation2 + $0x58] sm:$0xff] 0.0
          %510 = vst [vmem:[#allocation2 + $0x60] sm:$0xff] 0.0
          %511 = vst [vmem:[#allocation2 + $0x68] sm:$0xff] 0.0
          %512 = vst [vmem:[#allocation2 + $0x70] sm:$0xff] 0.0
          %513 = vst [vmem:[#allocation2 + $0x78] sm:$0xff] 0.0
        $region76: #{tpu_custom_call.1} parent=55 // pred_fallthru
          _
        %v514 = vld [vmem:[%s480] sm:$0xf]
        %v515 = vld [vmem:[%s480 + $0x4] sm:$0xf]
        %v516 = vld [vmem:[%s480 + $0x8] sm:$0xf]
        %v517 = vld [vmem:[%s480 + $0xc] sm:$0xf]
        %v518 = vld [vmem:[%s480 + $0x10] sm:$0xf]
        %v519 = vld [vmem:[%s480 + $0x14] sm:$0xf]
        %v520 = vld [vmem:[%s480 + $0x18] sm:$0xf]
        %v521 = vld [vmem:[%s480 + $0x1c] sm:$0xf]
        %v522 = vld [vmem:[%s480 + $0x20] sm:$0xf]
        %v523 = vld [vmem:[%s480 + $0x24] sm:$0xf]
        %v524 = vld [vmem:[%s480 + $0x28] sm:$0xf]
        %v525 = vld [vmem:[%s480 + $0x2c] sm:$0xf]
        %v526 = vld [vmem:[%s480 + $0x30] sm:$0xf]
        %v527 = vld [vmem:[%s480 + $0x34] sm:$0xf]
        %v528 = vld [vmem:[%s480 + $0x38] sm:$0xf]
        %v529 = vld [vmem:[%s480 + $0x3c] sm:$0xf]
        %s530 = smul.u32 %s38, 128
        %p531 = scmp.eq.s32.totalorder %s36, 0
        // Predicated region
        $region77: #{tpu_custom_call.1} parent=55 // pred_check
          %p532 = pneg %p531
        $region78: #{tpu_custom_call.1} parent=55 // pred_check_branch
          %534 = sbr.rel (%p532) target = $region80
        $region79: #{tpu_custom_call.1} parent=55 // pred_region
          %s535 = sshra.s32 %s530, 3
          %s536 = sand.u32 %s530, 7
          %s537 = smul.addr %s535, 4
          %s538 = scalar_lea.vmem %s1, %s537
          %v539 = vld [vmem:[%s538] sm:$0xf]
          %v540 = vld [vmem:[%s538 + $0x4] sm:$0xf]
          %v541 = vld [vmem:[%s538 + $0x8] sm:$0xf]
          %v542 = vld [vmem:[%s538 + $0xc] sm:$0xf]
          %v543 = vld [vmem:[%s538 + $0x10] sm:$0xf]
          %v544 = vld [vmem:[%s538 + $0x14] sm:$0xf]
          %v545 = vld [vmem:[%s538 + $0x18] sm:$0xf]
          %v546 = vld [vmem:[%s538 + $0x1c] sm:$0xf]
          %v547 = vld [vmem:[%s538 + $0x20] sm:$0xf]
          %v548 = vld [vmem:[%s538 + $0x24] sm:$0xf]
          %v549 = vld [vmem:[%s538 + $0x28] sm:$0xf]
          %v550 = vld [vmem:[%s538 + $0x2c] sm:$0xf]
          %v551 = vld [vmem:[%s538 + $0x30] sm:$0xf]
          %v552 = vld [vmem:[%s538 + $0x34] sm:$0xf]
          %v553 = vld [vmem:[%s538 + $0x38] sm:$0xf]
          %v554 = vld [vmem:[%s538 + $0x3c] sm:$0xf]
          %v555 = vld [vmem:[#allocation2] sm:$0xff]
          %v556 = vld [vmem:[#allocation2 + $0x8] sm:$0xff]
          %v557 = vld [vmem:[#allocation2 + $0x10] sm:$0xff]
          %v558 = vld [vmem:[#allocation2 + $0x18] sm:$0xff]
          %v559 = vld [vmem:[#allocation2 + $0x20] sm:$0xff]
          %v560 = vld [vmem:[#allocation2 + $0x28] sm:$0xff]
          %v561 = vld [vmem:[#allocation2 + $0x30] sm:$0xff]
          %v562 = vld [vmem:[#allocation2 + $0x38] sm:$0xff]
          %v563 = vld [vmem:[#allocation2 + $0x40] sm:$0xff]
          %v564 = vld [vmem:[#allocation2 + $0x48] sm:$0xff]
          %v565 = vld [vmem:[#allocation2 + $0x50] sm:$0xff]
          %v566 = vld [vmem:[#allocation2 + $0x58] sm:$0xff]
          %v567 = vld [vmem:[#allocation2 + $0x60] sm:$0xff]
          %v568 = vld [vmem:[#allocation2 + $0x68] sm:$0xff]
          %v569 = vld [vmem:[#allocation2 + $0x70] sm:$0xff]
          %v570 = vld [vmem:[#allocation2 + $0x78] sm:$0xff]
          %v587 = vunpack.c.l.b16 %v514
          %v588 = vunpack.c.l.b16 %v515
          %v589 = vunpack.c.l.b16 %v516
          %v590 = vunpack.c.l.b16 %v517
          %v591 = vunpack.c.l.b16 %v518
          %v592 = vunpack.c.l.b16 %v519
          %v593 = vunpack.c.l.b16 %v520
          %v594 = vunpack.c.l.b16 %v521
          %v595 = vunpack.c.l.b16 %v522
          %v596 = vunpack.c.l.b16 %v523
          %v597 = vunpack.c.l.b16 %v524
          %v598 = vunpack.c.l.b16 %v525
          %v599 = vunpack.c.l.b16 %v526
          %v600 = vunpack.c.l.b16 %v527
          %v601 = vunpack.c.l.b16 %v528
          %v602 = vunpack.c.l.b16 %v529
          %v603 = vpack.c.b16 %v588, %v587
          %v604 = vpack.c.b16 %v590, %v589
          %v605 = vpack.c.b16 %v592, %v591
          %v606 = vpack.c.b16 %v594, %v593
          %v607 = vpack.c.b16 %v596, %v595
          %v608 = vpack.c.b16 %v598, %v597
          %v609 = vpack.c.b16 %v600, %v599
          %v610 = vpack.c.b16 %v602, %v601
          %v635 = vunpack.c.l.b16 %v539
          %v636 = vunpack.c.l.b16 %v540
          %v637 = vunpack.c.l.b16 %v541
          %v638 = vunpack.c.l.b16 %v542
          %v639 = vunpack.c.l.b16 %v543
          %v640 = vunpack.c.l.b16 %v544
          %v641 = vunpack.c.l.b16 %v545
          %v642 = vunpack.c.l.b16 %v546
          %v643 = vunpack.c.l.b16 %v547
          %v644 = vunpack.c.l.b16 %v548
          %v645 = vunpack.c.l.b16 %v549
          %v646 = vunpack.c.l.b16 %v550
          %v647 = vunpack.c.l.b16 %v551
          %v648 = vunpack.c.l.b16 %v552
          %v649 = vunpack.c.l.b16 %v553
          %v650 = vunpack.c.l.b16 %v554
          %v651 = vpack.c.b16 %v636, %v635
          %v652 = vpack.c.b16 %v638, %v637
          %v653 = vpack.c.b16 %v640, %v639
          %v654 = vpack.c.b16 %v642, %v641
          %v655 = vpack.c.b16 %v644, %v643
          %v656 = vpack.c.b16 %v646, %v645
          %v657 = vpack.c.b16 %v648, %v647
          %v658 = vpack.c.b16 %v650, %v649
          %667 = vmatprep.subr.bf16.mxu0 0
          %668 = vmatpush1.bf16.msra.mxu0 %v658
          %669 = vmatprep.subr.bf16.mxu0 0
          %670 = vmatpush1.bf16.msra.mxu0 %v657
          %671 = vmatprep.subr.bf16.mxu0 0
          %672 = vmatpush1.bf16.msra.mxu0 %v656
          %673 = vmatprep.subr.bf16.mxu0 0
          %674 = vmatpush1.bf16.msra.mxu0 %v655
          %675 = vmatprep.subr.bf16.mxu0 0
          %676 = vmatpush1.bf16.msra.mxu0 %v654
          %677 = vmatprep.subr.bf16.mxu0 0
          %678 = vmatpush1.bf16.msra.mxu0 %v653
          %679 = vmatprep.subr.bf16.mxu0 0
          %680 = vmatpush1.bf16.msra.mxu0 %v652
          %681 = vmatprep.subr.bf16.mxu0 0
          %682 = vmatpush1.bf16.msra.mxu0 %v651
          %683 = vmatprep.subr.bf16.mxu0 0
          %684 = vmatpush2.bf16.msra.mxu0 0
          %685 = vmatprep.subr.bf16.mxu0 0
          %686 = vmatpush2.bf16.msra.mxu0 0
          %687 = vmatprep.subr.bf16.mxu0 0
          %688 = vmatpush2.bf16.msra.mxu0 0
          %689 = vmatprep.subr.bf16.mxu0 0
          %690 = vmatpush2.bf16.msra.mxu0 0
          %691 = vmatprep.subr.bf16.mxu0 0
          %692 = vmatpush2.bf16.msra.mxu0 0
          %693 = vmatprep.subr.bf16.mxu0 0
          %694 = vmatpush2.bf16.msra.mxu0 0
          %695 = vmatprep.subr.bf16.mxu0 0
          %696 = vmatpush2.bf16.msra.mxu0 0
          %697 = vmatprep.subr.bf16.mxu0 0
          %698 = vmatpush2.bf16.msra.mxu0 0
          %699 = vmatprep.mubr.bf16.mxu0 0
          %700 = vmatmul.mubr.bf16.gmra.mxu0 %v603
          %v701 = vpop.f32.mrf.mxu0
          %v702 = vadd.f32 0.0, %v701
          %v703 = vpop.f32.mrf.mxu0
          %v704 = vpop.f32.mrf.mxu0
          %v705 = vadd.f32 0.0, %v704
          %v706 = vpop.f32.mrf.mxu0
          %707 = vmatprep.mubr.bf16.mxu0 0
          %708 = vmatmul.mubr.bf16.gmra.mxu0 %v604
          %v709 = vpop.f32.mrf.mxu0
          %v710 = vadd.f32 0.0, %v709
          %v711 = vpop.f32.mrf.mxu0
          %v712 = vpop.f32.mrf.mxu0
          %v713 = vadd.f32 0.0, %v712
          %v714 = vpop.f32.mrf.mxu0
          %715 = vmatprep.mubr.bf16.mxu0 0
          %716 = vmatmul.mubr.bf16.gmra.mxu0 %v605
          %v717 = vpop.f32.mrf.mxu0
          %v718 = vadd.f32 0.0, %v717
          %v719 = vpop.f32.mrf.mxu0
          %v720 = vpop.f32.mrf.mxu0
          %v721 = vadd.f32 0.0, %v720
          %v722 = vpop.f32.mrf.mxu0
          %723 = vmatprep.mubr.bf16.mxu0 0
          %724 = vmatmul.mubr.bf16.gmra.mxu0 %v606
          %v725 = vpop.f32.mrf.mxu0
          %v726 = vadd.f32 0.0, %v725
          %v727 = vpop.f32.mrf.mxu0
          %v728 = vpop.f32.mrf.mxu0
          %v729 = vadd.f32 0.0, %v728
          %v730 = vpop.f32.mrf.mxu0
          %731 = vmatprep.mubr.bf16.mxu0 0
          %732 = vmatmul.mubr.bf16.gmra.mxu0 %v607
          %v733 = vpop.f32.mrf.mxu0
          %v734 = vadd.f32 0.0, %v733
          %v735 = vpop.f32.mrf.mxu0
          %v736 = vpop.f32.mrf.mxu0
          %v737 = vadd.f32 0.0, %v736
          %v738 = vpop.f32.mrf.mxu0
          %739 = vmatprep.mubr.bf16.mxu0 0
          %740 = vmatmul.mubr.bf16.gmra.mxu0 %v608
          %v741 = vpop.f32.mrf.mxu0
          %v742 = vadd.f32 0.0, %v741
          %v743 = vpop.f32.mrf.mxu0
          %v744 = vpop.f32.mrf.mxu0
          %v745 = vadd.f32 0.0, %v744
          %v746 = vpop.f32.mrf.mxu0
          %747 = vmatprep.mubr.bf16.mxu0 0
          %748 = vmatmul.mubr.bf16.gmra.mxu0 %v609
          %v749 = vpop.f32.mrf.mxu0
          %v750 = vadd.f32 0.0, %v749
          %v751 = vpop.f32.mrf.mxu0
          %v752 = vpop.f32.mrf.mxu0
          %v753 = vadd.f32 0.0, %v752
          %v754 = vpop.f32.mrf.mxu0
          %755 = vmatprep.mubr.bf16.mxu0 0
          %756 = vmatmul.mubr.bf16.gmra.mxu0 %v610
          %v757 = vpop.f32.mrf.mxu0
          %v758 = vadd.f32 0.0, %v757
          %v759 = vpop.f32.mrf.mxu0
          %v760 = vpop.f32.mrf.mxu0
          %v761 = vadd.f32 0.0, %v760
          %v762 = vpop.f32.mrf.mxu0
          %763 = vdwg.mxu0
          %v764 = vadd.f32 %v555, %v702
          %v765 = vadd.f32 %v556, %v705
          %v766 = vadd.f32 %v557, %v710
          %v767 = vadd.f32 %v558, %v713
          %v768 = vadd.f32 %v559, %v718
          %v769 = vadd.f32 %v560, %v721
          %v770 = vadd.f32 %v561, %v726
          %v771 = vadd.f32 %v562, %v729
          %v772 = vadd.f32 %v563, %v734
          %v773 = vadd.f32 %v564, %v737
          %v774 = vadd.f32 %v565, %v742
          %v775 = vadd.f32 %v566, %v745
          %v776 = vadd.f32 %v567, %v750
          %v777 = vadd.f32 %v568, %v753
          %v778 = vadd.f32 %v569, %v758
          %v779 = vadd.f32 %v570, %v761
          %780 = vst [vmem:[#allocation2] sm:$0xff] %v764
          %781 = vst [vmem:[#allocation2 + $0x8] sm:$0xff] %v765
          %782 = vst [vmem:[#allocation2 + $0x10] sm:$0xff] %v766
          %783 = vst [vmem:[#allocation2 + $0x18] sm:$0xff] %v767
          %784 = vst [vmem:[#allocation2 + $0x20] sm:$0xff] %v768
          %785 = vst [vmem:[#allocation2 + $0x28] sm:$0xff] %v769
          %786 = vst [vmem:[#allocation2 + $0x30] sm:$0xff] %v770
          %787 = vst [vmem:[#allocation2 + $0x38] sm:$0xff] %v771
          %788 = vst [vmem:[#allocation2 + $0x40] sm:$0xff] %v772
          %789 = vst [vmem:[#allocation2 + $0x48] sm:$0xff] %v773
          %790 = vst [vmem:[#allocation2 + $0x50] sm:$0xff] %v774
          %791 = vst [vmem:[#allocation2 + $0x58] sm:$0xff] %v775
          %792 = vst [vmem:[#allocation2 + $0x60] sm:$0xff] %v776
          %793 = vst [vmem:[#allocation2 + $0x68] sm:$0xff] %v777
          %794 = vst [vmem:[#allocation2 + $0x70] sm:$0xff] %v778
          %795 = vst [vmem:[#allocation2 + $0x78] sm:$0xff] %v779
        $region80: #{tpu_custom_call.1} parent=55 // pred_fallthru
          _
        %p796 = scmp.eq.s32.totalorder %s36, 1
        // Predicated region
        $region81: #{tpu_custom_call.1} parent=55 // pred_check
          %p797 = pneg %p796
        $region82: #{tpu_custom_call.1} parent=55 // pred_check_branch
          %799 = sbr.rel (%p797) target = $region84
        $region83: #{tpu_custom_call.1} parent=55 // pred_region
          %s800 = sshra.s32 %s530, 3
          %s801 = sand.u32 %s530, 7
          %s802 = smul.addr %s800, 4
          %s803 = scalar_lea.vmem [#allocation3], %s802
          %v804 = vld [vmem:[%s803] sm:$0xf]
          %v805 = vld [vmem:[%s803 + $0x4] sm:$0xf]
          %v806 = vld [vmem:[%s803 + $0x8] sm:$0xf]
          %v807 = vld [vmem:[%s803 + $0xc] sm:$0xf]
          %v808 = vld [vmem:[%s803 + $0x10] sm:$0xf]
          %v809 = vld [vmem:[%s803 + $0x14] sm:$0xf]
          %v810 = vld [vmem:[%s803 + $0x18] sm:$0xf]
          %v811 = vld [vmem:[%s803 + $0x1c] sm:$0xf]
          %v812 = vld [vmem:[%s803 + $0x20] sm:$0xf]
          %v813 = vld [vmem:[%s803 + $0x24] sm:$0xf]
          %v814 = vld [vmem:[%s803 + $0x28] sm:$0xf]
          %v815 = vld [vmem:[%s803 + $0x2c] sm:$0xf]
          %v816 = vld [vmem:[%s803 + $0x30] sm:$0xf]
          %v817 = vld [vmem:[%s803 + $0x34] sm:$0xf]
          %v818 = vld [vmem:[%s803 + $0x38] sm:$0xf]
          %v819 = vld [vmem:[%s803 + $0x3c] sm:$0xf]
          %v820 = vld [vmem:[#allocation2] sm:$0xff]
          %v821 = vld [vmem:[#allocation2 + $0x8] sm:$0xff]
          %v822 = vld [vmem:[#allocation2 + $0x10] sm:$0xff]
          %v823 = vld [vmem:[#allocation2 + $0x18] sm:$0xff]
          %v824 = vld [vmem:[#allocation2 + $0x20] sm:$0xff]
          %v825 = vld [vmem:[#allocation2 + $0x28] sm:$0xff]
          %v826 = vld [vmem:[#allocation2 + $0x30] sm:$0xff]
          %v827 = vld [vmem:[#allocation2 + $0x38] sm:$0xff]
          %v828 = vld [vmem:[#allocation2 + $0x40] sm:$0xff]
          %v829 = vld [vmem:[#allocation2 + $0x48] sm:$0xff]
          %v830 = vld [vmem:[#allocation2 + $0x50] sm:$0xff]
          %v831 = vld [vmem:[#allocation2 + $0x58] sm:$0xff]
          %v832 = vld [vmem:[#allocation2 + $0x60] sm:$0xff]
          %v833 = vld [vmem:[#allocation2 + $0x68] sm:$0xff]
          %v834 = vld [vmem:[#allocation2 + $0x70] sm:$0xff]
          %v835 = vld [vmem:[#allocation2 + $0x78] sm:$0xff]
          %v852 = vunpack.c.l.b16 %v514
          %v853 = vunpack.c.l.b16 %v515
          %v854 = vunpack.c.l.b16 %v516
          %v855 = vunpack.c.l.b16 %v517
          %v856 = vunpack.c.l.b16 %v518
          %v857 = vunpack.c.l.b16 %v519
          %v858 = vunpack.c.l.b16 %v520
          %v859 = vunpack.c.l.b16 %v521
          %v860 = vunpack.c.l.b16 %v522
          %v861 = vunpack.c.l.b16 %v523
          %v862 = vunpack.c.l.b16 %v524
          %v863 = vunpack.c.l.b16 %v525
          %v864 = vunpack.c.l.b16 %v526
          %v865 = vunpack.c.l.b16 %v527
          %v866 = vunpack.c.l.b16 %v528
          %v867 = vunpack.c.l.b16 %v529
          %v868 = vpack.c.b16 %v853, %v852
          %v869 = vpack.c.b16 %v855, %v854
          %v870 = vpack.c.b16 %v857, %v856
          %v871 = vpack.c.b16 %v859, %v858
          %v872 = vpack.c.b16 %v861, %v860
          %v873 = vpack.c.b16 %v863, %v862
          %v874 = vpack.c.b16 %v865, %v864
          %v875 = vpack.c.b16 %v867, %v866
          %v900 = vunpack.c.l.b16 %v804
          %v901 = vunpack.c.l.b16 %v805
          %v902 = vunpack.c.l.b16 %v806
          %v903 = vunpack.c.l.b16 %v807
          %v904 = vunpack.c.l.b16 %v808
          %v905 = vunpack.c.l.b16 %v809
          %v906 = vunpack.c.l.b16 %v810
          %v907 = vunpack.c.l.b16 %v811
          %v908 = vunpack.c.l.b16 %v812
          %v909 = vunpack.c.l.b16 %v813
          %v910 = vunpack.c.l.b16 %v814
          %v911 = vunpack.c.l.b16 %v815
          %v912 = vunpack.c.l.b16 %v816
          %v913 = vunpack.c.l.b16 %v817
          %v914 = vunpack.c.l.b16 %v818
          %v915 = vunpack.c.l.b16 %v819
          %v916 = vpack.c.b16 %v901, %v900
          %v917 = vpack.c.b16 %v903, %v902
          %v918 = vpack.c.b16 %v905, %v904
          %v919 = vpack.c.b16 %v907, %v906
          %v920 = vpack.c.b16 %v909, %v908
          %v921 = vpack.c.b16 %v911, %v910
          %v922 = vpack.c.b16 %v913, %v912
          %v923 = vpack.c.b16 %v915, %v914
          %932 = vmatprep.subr.bf16.mxu0 0
          %933 = vmatpush1.bf16.msra.mxu0 %v923
          %934 = vmatprep.subr.bf16.mxu0 0
          %935 = vmatpush1.bf16.msra.mxu0 %v922
          %936 = vmatprep.subr.bf16.mxu0 0
          %937 = vmatpush1.bf16.msra.mxu0 %v921
          %938 = vmatprep.subr.bf16.mxu0 0
          %939 = vmatpush1.bf16.msra.mxu0 %v920
          %940 = vmatprep.subr.bf16.mxu0 0
          %941 = vmatpush1.bf16.msra.mxu0 %v919
          %942 = vmatprep.subr.bf16.mxu0 0
          %943 = vmatpush1.bf16.msra.mxu0 %v918
          %944 = vmatprep.subr.bf16.mxu0 0
          %945 = vmatpush1.bf16.msra.mxu0 %v917
          %946 = vmatprep.subr.bf16.mxu0 0
          %947 = vmatpush1.bf16.msra.mxu0 %v916
          %948 = vmatprep.subr.bf16.mxu0 0
          %949 = vmatpush2.bf16.msra.mxu0 0
          %950 = vmatprep.subr.bf16.mxu0 0
          %951 = vmatpush2.bf16.msra.mxu0 0
          %952 = vmatprep.subr.bf16.mxu0 0
          %953 = vmatpush2.bf16.msra.mxu0 0
          %954 = vmatprep.subr.bf16.mxu0 0
          %955 = vmatpush2.bf16.msra.mxu0 0
          %956 = vmatprep.subr.bf16.mxu0 0
          %957 = vmatpush2.bf16.msra.mxu0 0
          %958 = vmatprep.subr.bf16.mxu0 0
          %959 = vmatpush2.bf16.msra.mxu0 0
          %960 = vmatprep.subr.bf16.mxu0 0
          %961 = vmatpush2.bf16.msra.mxu0 0
          %962 = vmatprep.subr.bf16.mxu0 0
          %963 = vmatpush2.bf16.msra.mxu0 0
          %964 = vmatprep.mubr.bf16.mxu0 0
          %965 = vmatmul.mubr.bf16.gmra.mxu0 %v868
          %v966 = vpop.f32.mrf.mxu0
          %v967 = vadd.f32 0.0, %v966
          %v968 = vpop.f32.mrf.mxu0
          %v969 = vpop.f32.mrf.mxu0
          %v970 = vadd.f32 0.0, %v969
          %v971 = vpop.f32.mrf.mxu0
          %972 = vmatprep.mubr.bf16.mxu0 0
          %973 = vmatmul.mubr.bf16.gmra.mxu0 %v869
          %v974 = vpop.f32.mrf.mxu0
          %v975 = vadd.f32 0.0, %v974
          %v976 = vpop.f32.mrf.mxu0
          %v977 = vpop.f32.mrf.mxu0
          %v978 = vadd.f32 0.0, %v977
          %v979 = vpop.f32.mrf.mxu0
          %980 = vmatprep.mubr.bf16.mxu0 0
          %981 = vmatmul.mubr.bf16.gmra.mxu0 %v870
          %v982 = vpop.f32.mrf.mxu0
          %v983 = vadd.f32 0.0, %v982
          %v984 = vpop.f32.mrf.mxu0
          %v985 = vpop.f32.mrf.mxu0
          %v986 = vadd.f32 0.0, %v985
          %v987 = vpop.f32.mrf.mxu0
          %988 = vmatprep.mubr.bf16.mxu0 0
          %989 = vmatmul.mubr.bf16.gmra.mxu0 %v871
          %v990 = vpop.f32.mrf.mxu0
          %v991 = vadd.f32 0.0, %v990
          %v992 = vpop.f32.mrf.mxu0
          %v993 = vpop.f32.mrf.mxu0
          %v994 = vadd.f32 0.0, %v993
          %v995 = vpop.f32.mrf.mxu0
          %996 = vmatprep.mubr.bf16.mxu0 0
          %997 = vmatmul.mubr.bf16.gmra.mxu0 %v872
          %v998 = vpop.f32.mrf.mxu0
          %v999 = vadd.f32 0.0, %v998
          %v1000 = vpop.f32.mrf.mxu0
          %v1001 = vpop.f32.mrf.mxu0
          %v1002 = vadd.f32 0.0, %v1001
          %v1003 = vpop.f32.mrf.mxu0
          %1004 = vmatprep.mubr.bf16.mxu0 0
          %1005 = vmatmul.mubr.bf16.gmra.mxu0 %v873
          %v1006 = vpop.f32.mrf.mxu0
          %v1007 = vadd.f32 0.0, %v1006
          %v1008 = vpop.f32.mrf.mxu0
          %v1009 = vpop.f32.mrf.mxu0
          %v1010 = vadd.f32 0.0, %v1009
          %v1011 = vpop.f32.mrf.mxu0
          %1012 = vmatprep.mubr.bf16.mxu0 0
          %1013 = vmatmul.mubr.bf16.gmra.mxu0 %v874
          %v1014 = vpop.f32.mrf.mxu0
          %v1015 = vadd.f32 0.0, %v1014
          %v1016 = vpop.f32.mrf.mxu0
          %v1017 = vpop.f32.mrf.mxu0
          %v1018 = vadd.f32 0.0, %v1017
          %v1019 = vpop.f32.mrf.mxu0
          %1020 = vmatprep.mubr.bf16.mxu0 0
          %1021 = vmatmul.mubr.bf16.gmra.mxu0 %v875
          %v1022 = vpop.f32.mrf.mxu0
          %v1023 = vadd.f32 0.0, %v1022
          %v1024 = vpop.f32.mrf.mxu0
          %v1025 = vpop.f32.mrf.mxu0
          %v1026 = vadd.f32 0.0, %v1025
          %v1027 = vpop.f32.mrf.mxu0
          %1028 = vdwg.mxu0
          %v1029 = vadd.f32 %v820, %v967
          %v1030 = vadd.f32 %v821, %v970
          %v1031 = vadd.f32 %v822, %v975
          %v1032 = vadd.f32 %v823, %v978
          %v1033 = vadd.f32 %v824, %v983
          %v1034 = vadd.f32 %v825, %v986
          %v1035 = vadd.f32 %v826, %v991
          %v1036 = vadd.f32 %v827, %v994
          %v1037 = vadd.f32 %v828, %v999
          %v1038 = vadd.f32 %v829, %v1002
          %v1039 = vadd.f32 %v830, %v1007
          %v1040 = vadd.f32 %v831, %v1010
          %v1041 = vadd.f32 %v832, %v1015
          %v1042 = vadd.f32 %v833, %v1018
          %v1043 = vadd.f32 %v834, %v1023
          %v1044 = vadd.f32 %v835, %v1026
          %1045 = vst [vmem:[#allocation2] sm:$0xff] %v1029
          %1046 = vst [vmem:[#allocation2 + $0x8] sm:$0xff] %v1030
          %1047 = vst [vmem:[#allocation2 + $0x10] sm:$0xff] %v1031
          %1048 = vst [vmem:[#allocation2 + $0x18] sm:$0xff] %v1032
          %1049 = vst [vmem:[#allocation2 + $0x20] sm:$0xff] %v1033
          %1050 = vst [vmem:[#allocation2 + $0x28] sm:$0xff] %v1034
          %1051 = vst [vmem:[#allocation2 + $0x30] sm:$0xff] %v1035
          %1052 = vst [vmem:[#allocation2 + $0x38] sm:$0xff] %v1036
          %1053 = vst [vmem:[#allocation2 + $0x40] sm:$0xff] %v1037
          %1054 = vst [vmem:[#allocation2 + $0x48] sm:$0xff] %v1038
          %1055 = vst [vmem:[#allocation2 + $0x50] sm:$0xff] %v1039
          %1056 = vst [vmem:[#allocation2 + $0x58] sm:$0xff] %v1040
          %1057 = vst [vmem:[#allocation2 + $0x60] sm:$0xff] %v1041
          %1058 = vst [vmem:[#allocation2 + $0x68] sm:$0xff] %v1042
          %1059 = vst [vmem:[#allocation2 + $0x70] sm:$0xff] %v1043
          %1060 = vst [vmem:[#allocation2 + $0x78] sm:$0xff] %v1044
        $region84: #{tpu_custom_call.1} parent=55 // pred_fallthru
          _
        // Predicated region
        $region85: #{tpu_custom_call.1} parent=55 // pred_check
          %p1061 = pneg %p494
        $region86: #{tpu_custom_call.1} parent=55 // pred_check_branch
          %1063 = sbr.rel (%p1061) target = $region88
        $region87: #{tpu_custom_call.1} parent=55 // pred_region
          %s1064 = smul.u32 %s37, 128
          %v1065 = vld [vmem:[%s486] sm:$0xff]
          %v1066 = vld [vmem:[%s486 + $0x8] sm:$0xff]
          %v1067 = vld [vmem:[%s486 + $0x10] sm:$0xff]
          %v1068 = vld [vmem:[%s486 + $0x18] sm:$0xff]
          %v1069 = vld [vmem:[%s486 + $0x20] sm:$0xff]
          %v1070 = vld [vmem:[%s486 + $0x28] sm:$0xff]
          %v1071 = vld [vmem:[%s486 + $0x30] sm:$0xff]
          %v1072 = vld [vmem:[%s486 + $0x38] sm:$0xff]
          %v1073 = vld [vmem:[%s486 + $0x40] sm:$0xff]
          %v1074 = vld [vmem:[%s486 + $0x48] sm:$0xff]
          %v1075 = vld [vmem:[%s486 + $0x50] sm:$0xff]
          %v1076 = vld [vmem:[%s486 + $0x58] sm:$0xff]
          %v1077 = vld [vmem:[%s486 + $0x60] sm:$0xff]
          %v1078 = vld [vmem:[%s486 + $0x68] sm:$0xff]
          %v1079 = vld [vmem:[%s486 + $0x70] sm:$0xff]
          %v1080 = vld [vmem:[%s486 + $0x78] sm:$0xff]
          // Predicated region
          $region89: #{tpu_custom_call.1} parent=87 // pred_check
            %p1081 = pneg %p531
          $region90: #{tpu_custom_call.1} parent=87 // pred_check_branch
            %1083 = sbr.rel (%p1081) target = $region92
          $region91: #{tpu_custom_call.1} parent=87 // pred_region
            %v1084 = vld [vmem:[#allocation2] sm:$0xff]
            %v1085 = vld [vmem:[#allocation2 + $0x8] sm:$0xff]
            %v1086 = vld [vmem:[#allocation2 + $0x10] sm:$0xff]
            %v1087 = vld [vmem:[#allocation2 + $0x18] sm:$0xff]
            %v1088 = vld [vmem:[#allocation2 + $0x20] sm:$0xff]
            %v1089 = vld [vmem:[#allocation2 + $0x28] sm:$0xff]
            %v1090 = vld [vmem:[#allocation2 + $0x30] sm:$0xff]
            %v1091 = vld [vmem:[#allocation2 + $0x38] sm:$0xff]
            %v1092 = vld [vmem:[#allocation2 + $0x40] sm:$0xff]
            %v1093 = vld [vmem:[#allocation2 + $0x48] sm:$0xff]
            %v1094 = vld [vmem:[#allocation2 + $0x50] sm:$0xff]
            %v1095 = vld [vmem:[#allocation2 + $0x58] sm:$0xff]
            %v1096 = vld [vmem:[#allocation2 + $0x60] sm:$0xff]
            %v1097 = vld [vmem:[#allocation2 + $0x68] sm:$0xff]
            %v1098 = vld [vmem:[#allocation2 + $0x70] sm:$0xff]
            %v1099 = vld [vmem:[#allocation2 + $0x78] sm:$0xff]
            %1101 = vset.pattern.permute.xlu0 0
            %1102 = vperm.xlu0 %1101, %v1065
            %v1103 = vpop.permute.xlu0 %1102
            %1106 = vset.pattern.permute.xlu0 0
            %1107 = vperm.xlu0 %1106, %v1066
            %v1108 = vpop.permute.xlu0 %1107
            %1111 = vset.pattern.permute.xlu0 0
            %1112 = vperm.xlu0 %1111, %v1067
            %v1113 = vpop.permute.xlu0 %1112
            %1116 = vset.pattern.permute.xlu0 0
            %1117 = vperm.xlu0 %1116, %v1068
            %v1118 = vpop.permute.xlu0 %1117
            %1121 = vset.pattern.permute.xlu0 0
            %1122 = vperm.xlu0 %1121, %v1069
            %v1123 = vpop.permute.xlu0 %1122
            %1126 = vset.pattern.permute.xlu0 0
            %1127 = vperm.xlu0 %1126, %v1070
            %v1128 = vpop.permute.xlu0 %1127
            %1131 = vset.pattern.permute.xlu0 0
            %1132 = vperm.xlu0 %1131, %v1071
            %v1133 = vpop.permute.xlu0 %1132
            %1136 = vset.pattern.permute.xlu0 0
            %1137 = vperm.xlu0 %1136, %v1072
            %v1138 = vpop.permute.xlu0 %1137
            %1141 = vset.pattern.permute.xlu0 0
            %1142 = vperm.xlu0 %1141, %v1073
            %v1143 = vpop.permute.xlu0 %1142
            %1146 = vset.pattern.permute.xlu0 0
            %1147 = vperm.xlu0 %1146, %v1074
            %v1148 = vpop.permute.xlu0 %1147
            %1151 = vset.pattern.permute.xlu0 0
            %1152 = vperm.xlu0 %1151, %v1075
            %v1153 = vpop.permute.xlu0 %1152
            %1156 = vset.pattern.permute.xlu0 0
            %1157 = vperm.xlu0 %1156, %v1076
            %v1158 = vpop.permute.xlu0 %1157
            %1161 = vset.pattern.permute.xlu0 0
            %1162 = vperm.xlu0 %1161, %v1077
            %v1163 = vpop.permute.xlu0 %1162
            %1166 = vset.pattern.permute.xlu0 0
            %1167 = vperm.xlu0 %1166, %v1078
            %v1168 = vpop.permute.xlu0 %1167
            %1171 = vset.pattern.permute.xlu0 0
            %1172 = vperm.xlu0 %1171, %v1079
            %v1173 = vpop.permute.xlu0 %1172
            %1176 = vset.pattern.permute.xlu0 0
            %1177 = vperm.xlu0 %1176, %v1080
            %v1178 = vpop.permute.xlu0 %1177
            %v1180 = vmul.f32 %v1084, %v1103
            %v1181 = vmul.f32 %v1085, %v1108
            %v1182 = vmul.f32 %v1086, %v1113
            %v1183 = vmul.f32 %v1087, %v1118
            %v1184 = vmul.f32 %v1088, %v1123
            %v1185 = vmul.f32 %v1089, %v1128
            %v1186 = vmul.f32 %v1090, %v1133
            %v1187 = vmul.f32 %v1091, %v1138
            %v1188 = vmul.f32 %v1092, %v1143
            %v1189 = vmul.f32 %v1093, %v1148
            %v1190 = vmul.f32 %v1094, %v1153
            %v1191 = vmul.f32 %v1095, %v1158
            %v1192 = vmul.f32 %v1096, %v1163
            %v1193 = vmul.f32 %v1097, %v1168
            %v1194 = vmul.f32 %v1098, %v1173
            %v1195 = vmul.f32 %v1099, %v1178
            %s1196 = sshra.s32 %s1064, 3
            %s1197 = sand.u32 %s1064, 7
            %s1198 = smul.addr %s1196, 4
            %s1199 = scalar_lea.vmem %s1, %s1198
            %v1200 = vld [vmem:[%s1199] sm:$0xf]
            %v1201 = vld [vmem:[%s1199 + $0x4] sm:$0xf]
            %v1202 = vld [vmem:[%s1199 + $0x8] sm:$0xf]
            %v1203 = vld [vmem:[%s1199 + $0xc] sm:$0xf]
            %v1204 = vld [vmem:[%s1199 + $0x10] sm:$0xf]
            %v1205 = vld [vmem:[%s1199 + $0x14] sm:$0xf]
            %v1206 = vld [vmem:[%s1199 + $0x18] sm:$0xf]
            %v1207 = vld [vmem:[%s1199 + $0x1c] sm:$0xf]
            %v1208 = vld [vmem:[%s1199 + $0x20] sm:$0xf]
            %v1209 = vld [vmem:[%s1199 + $0x24] sm:$0xf]
            %v1210 = vld [vmem:[%s1199 + $0x28] sm:$0xf]
            %v1211 = vld [vmem:[%s1199 + $0x2c] sm:$0xf]
            %v1212 = vld [vmem:[%s1199 + $0x30] sm:$0xf]
            %v1213 = vld [vmem:[%s1199 + $0x34] sm:$0xf]
            %v1214 = vld [vmem:[%s1199 + $0x38] sm:$0xf]
            %v1215 = vld [vmem:[%s1199 + $0x3c] sm:$0xf]
            %v1216 = vpack.c.bf16 %v1181, %v1180
            %v1217 = vpack.c.bf16 %v1183, %v1182
            %v1218 = vpack.c.bf16 %v1185, %v1184
            %v1219 = vpack.c.bf16 %v1187, %v1186
            %v1220 = vpack.c.bf16 %v1189, %v1188
            %v1221 = vpack.c.bf16 %v1191, %v1190
            %v1222 = vpack.c.bf16 %v1193, %v1192
            %v1223 = vpack.c.bf16 %v1195, %v1194
            %v1224 = vld [vmem:[#allocation5] sm:$0xf]
            %v1225 = vld [vmem:[#allocation5 + $0x4] sm:$0xf]
            %v1226 = vld [vmem:[#allocation5 + $0x8] sm:$0xf]
            %v1227 = vld [vmem:[#allocation5 + $0xc] sm:$0xf]
            %v1228 = vld [vmem:[#allocation5 + $0x10] sm:$0xf]
            %v1229 = vld [vmem:[#allocation5 + $0x14] sm:$0xf]
            %v1230 = vld [vmem:[#allocation5 + $0x18] sm:$0xf]
            %v1231 = vld [vmem:[#allocation5 + $0x1c] sm:$0xf]
            %v1232 = vld [vmem:[#allocation5 + $0x20] sm:$0xf]
            %v1233 = vld [vmem:[#allocation5 + $0x24] sm:$0xf]
            %v1234 = vld [vmem:[#allocation5 + $0x28] sm:$0xf]
            %v1235 = vld [vmem:[#allocation5 + $0x2c] sm:$0xf]
            %v1236 = vld [vmem:[#allocation5 + $0x30] sm:$0xf]
            %v1237 = vld [vmem:[#allocation5 + $0x34] sm:$0xf]
            %v1238 = vld [vmem:[#allocation5 + $0x38] sm:$0xf]
            %v1239 = vld [vmem:[#allocation5 + $0x3c] sm:$0xf]
            %v1240 = vld [vmem:[#allocation8] sm:$0xf]
            %v1241 = vld [vmem:[#allocation8 + $0x4] sm:$0xf]
            %v1242 = vld [vmem:[#allocation8 + $0x8] sm:$0xf]
            %v1243 = vld [vmem:[#allocation8 + $0xc] sm:$0xf]
            %v1244 = vld [vmem:[#allocation8 + $0x10] sm:$0xf]
            %v1245 = vld [vmem:[#allocation8 + $0x14] sm:$0xf]
            %v1246 = vld [vmem:[#allocation8 + $0x18] sm:$0xf]
            %v1247 = vld [vmem:[#allocation8 + $0x1c] sm:$0xf]
            %v1248 = vld [vmem:[#allocation8 + $0x20] sm:$0xf]
            %v1249 = vld [vmem:[#allocation8 + $0x24] sm:$0xf]
            %v1250 = vld [vmem:[#allocation8 + $0x28] sm:$0xf]
            %v1251 = vld [vmem:[#allocation8 + $0x2c] sm:$0xf]
            %v1252 = vld [vmem:[#allocation8 + $0x30] sm:$0xf]
            %v1253 = vld [vmem:[#allocation8 + $0x34] sm:$0xf]
            %v1254 = vld [vmem:[#allocation8 + $0x38] sm:$0xf]
            %v1255 = vld [vmem:[#allocation8 + $0x3c] sm:$0xf]
            %v1272 = vunpack.c.l.b16 %v1200
            %v1273 = vunpack.c.l.b16 %v1201
            %v1274 = vunpack.c.l.b16 %v1202
            %v1275 = vunpack.c.l.b16 %v1203
            %v1276 = vunpack.c.l.b16 %v1204
            %v1277 = vunpack.c.l.b16 %v1205
            %v1278 = vunpack.c.l.b16 %v1206
            %v1279 = vunpack.c.l.b16 %v1207
            %v1280 = vunpack.c.l.b16 %v1208
            %v1281 = vunpack.c.l.b16 %v1209
            %v1282 = vunpack.c.l.b16 %v1210
            %v1283 = vunpack.c.l.b16 %v1211
            %v1284 = vunpack.c.l.b16 %v1212
            %v1285 = vunpack.c.l.b16 %v1213
            %v1286 = vunpack.c.l.b16 %v1214
            %v1287 = vunpack.c.l.b16 %v1215
            %v1288 = vpack.c.b16 %v1273, %v1272
            %v1289 = vpack.c.b16 %v1275, %v1274
            %v1290 = vpack.c.b16 %v1277, %v1276
            %v1291 = vpack.c.b16 %v1279, %v1278
            %v1292 = vpack.c.b16 %v1281, %v1280
            %v1293 = vpack.c.b16 %v1283, %v1282
            %v1294 = vpack.c.b16 %v1285, %v1284
            %v1295 = vpack.c.b16 %v1287, %v1286
            %v1320 = vunpack.c.l.b16 %v1240
            %v1321 = vunpack.c.l.b16 %v1241
            %v1322 = vunpack.c.l.b16 %v1242
            %v1323 = vunpack.c.l.b16 %v1243
            %v1324 = vunpack.c.l.b16 %v1244
            %v1325 = vunpack.c.l.b16 %v1245
            %v1326 = vunpack.c.l.b16 %v1246
            %v1327 = vunpack.c.l.b16 %v1247
            %v1328 = vunpack.c.l.b16 %v1248
            %v1329 = vunpack.c.l.b16 %v1249
            %v1330 = vunpack.c.l.b16 %v1250
            %v1331 = vunpack.c.l.b16 %v1251
            %v1332 = vunpack.c.l.b16 %v1252
            %v1333 = vunpack.c.l.b16 %v1253
            %v1334 = vunpack.c.l.b16 %v1254
            %v1335 = vunpack.c.l.b16 %v1255
            %v1336 = vpack.c.b16 %v1321, %v1320
            %v1337 = vpack.c.b16 %v1323, %v1322
            %v1338 = vpack.c.b16 %v1325, %v1324
            %v1339 = vpack.c.b16 %v1327, %v1326
            %v1340 = vpack.c.b16 %v1329, %v1328
            %v1341 = vpack.c.b16 %v1331, %v1330
            %v1342 = vpack.c.b16 %v1333, %v1332
            %v1343 = vpack.c.b16 %v1335, %v1334
            %1352 = vmatprep.subr.bf16.mxu0 0
            %1353 = vmatpush1.bf16.msra.mxu0 %v1343
            %1354 = vmatprep.subr.bf16.mxu0 0
            %1355 = vmatpush1.bf16.msra.mxu0 %v1342
            %1356 = vmatprep.subr.bf16.mxu0 0
            %1357 = vmatpush1.bf16.msra.mxu0 %v1341
            %1358 = vmatprep.subr.bf16.mxu0 0
            %1359 = vmatpush1.bf16.msra.mxu0 %v1340
            %1360 = vmatprep.subr.bf16.mxu0 0
            %1361 = vmatpush1.bf16.msra.mxu0 %v1339
            %1362 = vmatprep.subr.bf16.mxu0 0
            %1363 = vmatpush1.bf16.msra.mxu0 %v1338
            %1364 = vmatprep.subr.bf16.mxu0 0
            %1365 = vmatpush1.bf16.msra.mxu0 %v1337
            %1366 = vmatprep.subr.bf16.mxu0 0
            %1367 = vmatpush1.bf16.msra.mxu0 %v1336
            %1368 = vmatprep.subr.bf16.mxu0 0
            %1369 = vmatpush2.bf16.msra.mxu0 0
            %1370 = vmatprep.subr.bf16.mxu0 0
            %1371 = vmatpush2.bf16.msra.mxu0 0
            %1372 = vmatprep.subr.bf16.mxu0 0
            %1373 = vmatpush2.bf16.msra.mxu0 0
            %1374 = vmatprep.subr.bf16.mxu0 0
            %1375 = vmatpush2.bf16.msra.mxu0 0
            %1376 = vmatprep.subr.bf16.mxu0 0
            %1377 = vmatpush2.bf16.msra.mxu0 0
            %1378 = vmatprep.subr.bf16.mxu0 0
            %1379 = vmatpush2.bf16.msra.mxu0 0
            %1380 = vmatprep.subr.bf16.mxu0 0
            %1381 = vmatpush2.bf16.msra.mxu0 0
            %1382 = vmatprep.subr.bf16.mxu0 0
            %1383 = vmatpush2.bf16.msra.mxu0 0
            %1384 = vmatprep.mubr.bf16.mxu0 0
            %1385 = vmatmul.mubr.bf16.gmra.mxu0 %v1288
            %v1386 = vpop.f32.mrf.mxu0
            %v1387 = vadd.f32 0.0, %v1386
            %v1388 = vpop.f32.mrf.mxu0
            %v1389 = vpop.f32.mrf.mxu0
            %v1390 = vadd.f32 0.0, %v1389
            %v1391 = vpop.f32.mrf.mxu0
            %1392 = vmatprep.mubr.bf16.mxu0 0
            %1393 = vmatmul.mubr.bf16.gmra.mxu0 %v1289
            %v1394 = vpop.f32.mrf.mxu0
            %v1395 = vadd.f32 0.0, %v1394
            %v1396 = vpop.f32.mrf.mxu0
            %v1397 = vpop.f32.mrf.mxu0
            %v1398 = vadd.f32 0.0, %v1397
            %v1399 = vpop.f32.mrf.mxu0
            %1400 = vmatprep.mubr.bf16.mxu0 0
            %1401 = vmatmul.mubr.bf16.gmra.mxu0 %v1290
            %v1402 = vpop.f32.mrf.mxu0
            %v1403 = vadd.f32 0.0, %v1402
            %v1404 = vpop.f32.mrf.mxu0
            %v1405 = vpop.f32.mrf.mxu0
            %v1406 = vadd.f32 0.0, %v1405
            %v1407 = vpop.f32.mrf.mxu0
            %1408 = vmatprep.mubr.bf16.mxu0 0
            %1409 = vmatmul.mubr.bf16.gmra.mxu0 %v1291
            %v1410 = vpop.f32.mrf.mxu0
            %v1411 = vadd.f32 0.0, %v1410
            %v1412 = vpop.f32.mrf.mxu0
            %v1413 = vpop.f32.mrf.mxu0
            %v1414 = vadd.f32 0.0, %v1413
            %v1415 = vpop.f32.mrf.mxu0
            %1416 = vmatprep.mubr.bf16.mxu0 0
            %1417 = vmatmul.mubr.bf16.gmra.mxu0 %v1292
            %v1418 = vpop.f32.mrf.mxu0
            %v1419 = vadd.f32 0.0, %v1418
            %v1420 = vpop.f32.mrf.mxu0
            %v1421 = vpop.f32.mrf.mxu0
            %v1422 = vadd.f32 0.0, %v1421
            %v1423 = vpop.f32.mrf.mxu0
            %1424 = vmatprep.mubr.bf16.mxu0 0
            %1425 = vmatmul.mubr.bf16.gmra.mxu0 %v1293
            %v1426 = vpop.f32.mrf.mxu0
            %v1427 = vadd.f32 0.0, %v1426
            %v1428 = vpop.f32.mrf.mxu0
            %v1429 = vpop.f32.mrf.mxu0
            %v1430 = vadd.f32 0.0, %v1429
            %v1431 = vpop.f32.mrf.mxu0
            %1432 = vmatprep.mubr.bf16.mxu0 0
            %1433 = vmatmul.mubr.bf16.gmra.mxu0 %v1294
            %v1434 = vpop.f32.mrf.mxu0
            %v1435 = vadd.f32 0.0, %v1434
            %v1436 = vpop.f32.mrf.mxu0
            %v1437 = vpop.f32.mrf.mxu0
            %v1438 = vadd.f32 0.0, %v1437
            %v1439 = vpop.f32.mrf.mxu0
            %1440 = vmatprep.mubr.bf16.mxu0 0
            %1441 = vmatmul.mubr.bf16.gmra.mxu0 %v1295
            %v1442 = vpop.f32.mrf.mxu0
            %v1443 = vadd.f32 0.0, %v1442
            %v1444 = vpop.f32.mrf.mxu0
            %v1445 = vpop.f32.mrf.mxu0
            %v1446 = vadd.f32 0.0, %v1445
            %v1447 = vpop.f32.mrf.mxu0
            %1448 = vdwg.mxu0
            %v1465 = vunpack.c.l.b16 %v1224
            %v1466 = vunpack.c.l.b16 %v1225
            %v1467 = vunpack.c.l.b16 %v1226
            %v1468 = vunpack.c.l.b16 %v1227
            %v1469 = vunpack.c.l.b16 %v1228
            %v1470 = vunpack.c.l.b16 %v1229
            %v1471 = vunpack.c.l.b16 %v1230
            %v1472 = vunpack.c.l.b16 %v1231
            %v1473 = vunpack.c.l.b16 %v1232
            %v1474 = vunpack.c.l.b16 %v1233
            %v1475 = vunpack.c.l.b16 %v1234
            %v1476 = vunpack.c.l.b16 %v1235
            %v1477 = vunpack.c.l.b16 %v1236
            %v1478 = vunpack.c.l.b16 %v1237
            %v1479 = vunpack.c.l.b16 %v1238
            %v1480 = vunpack.c.l.b16 %v1239
            %v1481 = vpack.c.b16 %v1466, %v1465
            %v1482 = vpack.c.b16 %v1468, %v1467
            %v1483 = vpack.c.b16 %v1470, %v1469
            %v1484 = vpack.c.b16 %v1472, %v1471
            %v1485 = vpack.c.b16 %v1474, %v1473
            %v1486 = vpack.c.b16 %v1476, %v1475
            %v1487 = vpack.c.b16 %v1478, %v1477
            %v1488 = vpack.c.b16 %v1480, %v1479
            %1497 = vmatprep.subr.bf16.mxu0 0
            %1498 = vmatpush1.bf16.msra.mxu0 %v1488
            %1499 = vmatprep.subr.bf16.mxu0 0
            %1500 = vmatpush1.bf16.msra.mxu0 %v1487
            %1501 = vmatprep.subr.bf16.mxu0 0
            %1502 = vmatpush1.bf16.msra.mxu0 %v1486
            %1503 = vmatprep.subr.bf16.mxu0 0
            %1504 = vmatpush1.bf16.msra.mxu0 %v1485
            %1505 = vmatprep.subr.bf16.mxu0 0
            %1506 = vmatpush1.bf16.msra.mxu0 %v1484
            %1507 = vmatprep.subr.bf16.mxu0 0
            %1508 = vmatpush1.bf16.msra.mxu0 %v1483
            %1509 = vmatprep.subr.bf16.mxu0 0
            %1510 = vmatpush1.bf16.msra.mxu0 %v1482
            %1511 = vmatprep.subr.bf16.mxu0 0
            %1512 = vmatpush1.bf16.msra.mxu0 %v1481
            %1513 = vmatprep.subr.bf16.mxu0 0
            %1514 = vmatpush2.bf16.msra.mxu0 0
            %1515 = vmatprep.subr.bf16.mxu0 0
            %1516 = vmatpush2.bf16.msra.mxu0 0
            %1517 = vmatprep.subr.bf16.mxu0 0
            %1518 = vmatpush2.bf16.msra.mxu0 0
            %1519 = vmatprep.subr.bf16.mxu0 0
            %1520 = vmatpush2.bf16.msra.mxu0 0
            %1521 = vmatprep.subr.bf16.mxu0 0
            %1522 = vmatpush2.bf16.msra.mxu0 0
            %1523 = vmatprep.subr.bf16.mxu0 0
            %1524 = vmatpush2.bf16.msra.mxu0 0
            %1525 = vmatprep.subr.bf16.mxu0 0
            %1526 = vmatpush2.bf16.msra.mxu0 0
            %1527 = vmatprep.subr.bf16.mxu0 0
            %1528 = vmatpush2.bf16.msra.mxu0 0
            %1529 = vmatprep.mubr.bf16.mxu0 0
            %1530 = vmatmul.mubr.bf16.gmra.mxu0 %v1216
            %v1531 = vpop.f32.mrf.mxu0
            %v1532 = vadd.f32 %v1387, %v1531
            %v1533 = vpop.f32.mrf.mxu0
            %v1534 = vpop.f32.mrf.mxu0
            %v1535 = vadd.f32 %v1390, %v1534
            %v1536 = vpop.f32.mrf.mxu0
            %1537 = vmatprep.mubr.bf16.mxu0 0
            %1538 = vmatmul.mubr.bf16.gmra.mxu0 %v1217
            %v1539 = vpop.f32.mrf.mxu0
            %v1540 = vadd.f32 %v1395, %v1539
            %v1541 = vpop.f32.mrf.mxu0
            %v1542 = vpop.f32.mrf.mxu0
            %v1543 = vadd.f32 %v1398, %v1542
            %v1544 = vpop.f32.mrf.mxu0
            %1545 = vmatprep.mubr.bf16.mxu0 0
            %1546 = vmatmul.mubr.bf16.gmra.mxu0 %v1218
            %v1547 = vpop.f32.mrf.mxu0
            %v1548 = vadd.f32 %v1403, %v1547
            %v1549 = vpop.f32.mrf.mxu0
            %v1550 = vpop.f32.mrf.mxu0
            %v1551 = vadd.f32 %v1406, %v1550
            %v1552 = vpop.f32.mrf.mxu0
            %1553 = vmatprep.mubr.bf16.mxu0 0
            %1554 = vmatmul.mubr.bf16.gmra.mxu0 %v1219
            %v1555 = vpop.f32.mrf.mxu0
            %v1556 = vadd.f32 %v1411, %v1555
            %v1557 = vpop.f32.mrf.mxu0
            %v1558 = vpop.f32.mrf.mxu0
            %v1559 = vadd.f32 %v1414, %v1558
            %v1560 = vpop.f32.mrf.mxu0
            %1561 = vmatprep.mubr.bf16.mxu0 0
            %1562 = vmatmul.mubr.bf16.gmra.mxu0 %v1220
            %v1563 = vpop.f32.mrf.mxu0
            %v1564 = vadd.f32 %v1419, %v1563
            %v1565 = vpop.f32.mrf.mxu0
            %v1566 = vpop.f32.mrf.mxu0
            %v1567 = vadd.f32 %v1422, %v1566
            %v1568 = vpop.f32.mrf.mxu0
            %1569 = vmatprep.mubr.bf16.mxu0 0
            %1570 = vmatmul.mubr.bf16.gmra.mxu0 %v1221
            %v1571 = vpop.f32.mrf.mxu0
            %v1572 = vadd.f32 %v1427, %v1571
            %v1573 = vpop.f32.mrf.mxu0
            %v1574 = vpop.f32.mrf.mxu0
            %v1575 = vadd.f32 %v1430, %v1574
            %v1576 = vpop.f32.mrf.mxu0
            %1577 = vmatprep.mubr.bf16.mxu0 0
            %1578 = vmatmul.mubr.bf16.gmra.mxu0 %v1222
            %v1579 = vpop.f32.mrf.mxu0
            %v1580 = vadd.f32 %v1435, %v1579
            %v1581 = vpop.f32.mrf.mxu0
            %v1582 = vpop.f32.mrf.mxu0
            %v1583 = vadd.f32 %v1438, %v1582
            %v1584 = vpop.f32.mrf.mxu0
            %1585 = vmatprep.mubr.bf16.mxu0 0
            %1586 = vmatmul.mubr.bf16.gmra.mxu0 %v1223
            %v1587 = vpop.f32.mrf.mxu0
            %v1588 = vadd.f32 %v1443, %v1587
            %v1589 = vpop.f32.mrf.mxu0
            %v1590 = vpop.f32.mrf.mxu0
            %v1591 = vadd.f32 %v1446, %v1590
            %v1592 = vpop.f32.mrf.mxu0
            %1593 = vdwg.mxu0
            %v1594 = vld [vmem:[%s5] sm:$0x1]
            %v1596 = vlaneseq
            %v1597 = vshrl.u32 %v1596, 7
            %v1598 = vsub.s32 0, %v1597
            %v1599 = vrot.slane %v1594, %v1598
            %v1601 = vadd.f32 %v1532, %v1599
            %v1602 = vadd.f32 %v1535, %v1599
            %v1603 = vadd.f32 %v1540, %v1599
            %v1604 = vadd.f32 %v1543, %v1599
            %v1605 = vadd.f32 %v1548, %v1599
            %v1606 = vadd.f32 %v1551, %v1599
            %v1607 = vadd.f32 %v1556, %v1599
            %v1608 = vadd.f32 %v1559, %v1599
            %v1609 = vadd.f32 %v1564, %v1599
            %v1610 = vadd.f32 %v1567, %v1599
            %v1611 = vadd.f32 %v1572, %v1599
            %v1612 = vadd.f32 %v1575, %v1599
            %v1613 = vadd.f32 %v1580, %v1599
            %v1614 = vadd.f32 %v1583, %v1599
            %v1615 = vadd.f32 %v1588, %v1599
            %v1616 = vadd.f32 %v1591, %v1599
            %v1617 = vmax.f32 %v1601, 0.0
            %v1618 = vmax.f32 %v1602, 0.0
            %v1619 = vmax.f32 %v1603, 0.0
            %v1620 = vmax.f32 %v1604, 0.0
            %v1621 = vmax.f32 %v1605, 0.0
            %v1622 = vmax.f32 %v1606, 0.0
            %v1623 = vmax.f32 %v1607, 0.0
            %v1624 = vmax.f32 %v1608, 0.0
            %v1625 = vmax.f32 %v1609, 0.0
            %v1626 = vmax.f32 %v1610, 0.0
            %v1627 = vmax.f32 %v1611, 0.0
            %v1628 = vmax.f32 %v1612, 0.0
            %v1629 = vmax.f32 %v1613, 0.0
            %v1630 = vmax.f32 %v1614, 0.0
            %v1631 = vmax.f32 %v1615, 0.0
            %v1632 = vmax.f32 %v1616, 0.0
            %1633 = vst [vmem:[%s465] sm:$0xff] %v1617
            %1634 = vst [vmem:[%s465 + $0x8] sm:$0xff] %v1618
            %1635 = vst [vmem:[%s465 + $0x10] sm:$0xff] %v1619
            %1636 = vst [vmem:[%s465 + $0x18] sm:$0xff] %v1620
            %1637 = vst [vmem:[%s465 + $0x20] sm:$0xff] %v1621
            %1638 = vst [vmem:[%s465 + $0x28] sm:$0xff] %v1622
            %1639 = vst [vmem:[%s465 + $0x30] sm:$0xff] %v1623
            %1640 = vst [vmem:[%s465 + $0x38] sm:$0xff] %v1624
            %1641 = vst [vmem:[%s465 + $0x40] sm:$0xff] %v1625
            %1642 = vst [vmem:[%s465 + $0x48] sm:$0xff] %v1626
            %1643 = vst [vmem:[%s465 + $0x50] sm:$0xff] %v1627
            %1644 = vst [vmem:[%s465 + $0x58] sm:$0xff] %v1628
            %1645 = vst [vmem:[%s465 + $0x60] sm:$0xff] %v1629
            %1646 = vst [vmem:[%s465 + $0x68] sm:$0xff] %v1630
            %1647 = vst [vmem:[%s465 + $0x70] sm:$0xff] %v1631
            %1648 = vst [vmem:[%s465 + $0x78] sm:$0xff] %v1632
            %v1649 = vpack.c.bf16 %v1618, %v1617
            %v1650 = vpack.c.bf16 %v1620, %v1619
            %v1651 = vpack.c.bf16 %v1622, %v1621
            %v1652 = vpack.c.bf16 %v1624, %v1623
            %v1653 = vpack.c.bf16 %v1626, %v1625
            %v1654 = vpack.c.bf16 %v1628, %v1627
            %v1655 = vpack.c.bf16 %v1630, %v1629
            %v1656 = vpack.c.bf16 %v1632, %v1631
            %v1665 = vunpack.c.l.b16 %v1649
            %v1666 = vunpack.c.h.b16 %v1649
            %v1667 = vunpack.c.l.b16 %v1650
            %v1668 = vunpack.c.h.b16 %v1650
            %v1669 = vunpack.c.l.b16 %v1651
            %v1670 = vunpack.c.h.b16 %v1651
            %v1671 = vunpack.c.l.b16 %v1652
            %v1672 = vunpack.c.h.b16 %v1652
            %v1673 = vunpack.c.l.b16 %v1653
            %v1674 = vunpack.c.h.b16 %v1653
            %v1675 = vunpack.c.l.b16 %v1654
            %v1676 = vunpack.c.h.b16 %v1654
            %v1677 = vunpack.c.l.b16 %v1655
            %v1678 = vunpack.c.h.b16 %v1655
            %v1679 = vunpack.c.l.b16 %v1656
            %v1680 = vunpack.c.h.b16 %v1656
            %v1681 = vpack.c.b16 %v1665, %v1665
            %v1682 = vpack.c.b16 %v1666, %v1666
            %v1683 = vpack.c.b16 %v1667, %v1667
            %v1684 = vpack.c.b16 %v1668, %v1668
            %v1685 = vpack.c.b16 %v1669, %v1669
            %v1686 = vpack.c.b16 %v1670, %v1670
            %v1687 = vpack.c.b16 %v1671, %v1671
            %v1688 = vpack.c.b16 %v1672, %v1672
            %v1689 = vpack.c.b16 %v1673, %v1673
            %v1690 = vpack.c.b16 %v1674, %v1674
            %v1691 = vpack.c.b16 %v1675, %v1675
            %v1692 = vpack.c.b16 %v1676, %v1676
            %v1693 = vpack.c.b16 %v1677, %v1677
            %v1694 = vpack.c.b16 %v1678, %v1678
            %v1695 = vpack.c.b16 %v1679, %v1679
            %v1696 = vpack.c.b16 %v1680, %v1680
            %s1713 = smul.addr %s1196, 4
            %s1714 = scalar_lea.vmem [#allocation3], %s1713
            %1715 = vst [vmem:[%s1714] sm:$0xf] %v1681
            %1716 = vst [vmem:[%s1714 + $0x4] sm:$0xf] %v1682
            %1717 = vst [vmem:[%s1714 + $0x8] sm:$0xf] %v1683
            %1718 = vst [vmem:[%s1714 + $0xc] sm:$0xf] %v1684
            %1719 = vst [vmem:[%s1714 + $0x10] sm:$0xf] %v1685
            %1720 = vst [vmem:[%s1714 + $0x14] sm:$0xf] %v1686
            %1721 = vst [vmem:[%s1714 + $0x18] sm:$0xf] %v1687
            %1722 = vst [vmem:[%s1714 + $0x1c] sm:$0xf] %v1688
            %1723 = vst [vmem:[%s1714 + $0x20] sm:$0xf] %v1689
            %1724 = vst [vmem:[%s1714 + $0x24] sm:$0xf] %v1690
            %1725 = vst [vmem:[%s1714 + $0x28] sm:$0xf] %v1691
            %1726 = vst [vmem:[%s1714 + $0x2c] sm:$0xf] %v1692
            %1727 = vst [vmem:[%s1714 + $0x30] sm:$0xf] %v1693
            %1728 = vst [vmem:[%s1714 + $0x34] sm:$0xf] %v1694
            %1729 = vst [vmem:[%s1714 + $0x38] sm:$0xf] %v1695
            %1730 = vst [vmem:[%s1714 + $0x3c] sm:$0xf] %v1696
            %p1731 = scmp.eq.s32.totalorder %s37, 0
            // Predicated region
            $region93: #{tpu_custom_call.1} parent=91 // pred_check
              %p1732 = pneg %p1731
            $region94: #{tpu_custom_call.1} parent=91 // pred_check_branch
              %1734 = sbr.rel (%p1732) target = $region96
            $region95: #{tpu_custom_call.1} parent=91 // pred_region
              %1735 = vst [vmem:[#allocation4] sm:$0xff] %v1617
              %1736 = vst [vmem:[#allocation4 + $0x8] sm:$0xff] %v1618
              %1737 = vst [vmem:[#allocation4 + $0x10] sm:$0xff] %v1619
              %1738 = vst [vmem:[#allocation4 + $0x18] sm:$0xff] %v1620
              %1739 = vst [vmem:[#allocation4 + $0x20] sm:$0xff] %v1621
              %1740 = vst [vmem:[#allocation4 + $0x28] sm:$0xff] %v1622
              %1741 = vst [vmem:[#allocation4 + $0x30] sm:$0xff] %v1623
              %1742 = vst [vmem:[#allocation4 + $0x38] sm:$0xff] %v1624
              %1743 = vst [vmem:[#allocation4 + $0x40] sm:$0xff] %v1625
              %1744 = vst [vmem:[#allocation4 + $0x48] sm:$0xff] %v1626
              %1745 = vst [vmem:[#allocation4 + $0x50] sm:$0xff] %v1627
              %1746 = vst [vmem:[#allocation4 + $0x58] sm:$0xff] %v1628
              %1747 = vst [vmem:[#allocation4 + $0x60] sm:$0xff] %v1629
              %1748 = vst [vmem:[#allocation4 + $0x68] sm:$0xff] %v1630
              %1749 = vst [vmem:[#allocation4 + $0x70] sm:$0xff] %v1631
              %1750 = vst [vmem:[#allocation4 + $0x78] sm:$0xff] %v1632
            $region96: #{tpu_custom_call.1} parent=91 // pred_fallthru
              _
          $region92: #{tpu_custom_call.1} parent=87 // pred_fallthru
            _
          // Predicated region
          $region97: #{tpu_custom_call.1} parent=87 // pred_check
            %p1751 = pneg %p796
          $region98: #{tpu_custom_call.1} parent=87 // pred_check_branch
            %1753 = sbr.rel (%p1751) target = $region100
          $region99: #{tpu_custom_call.1} parent=87 // pred_region
            %v1754 = vld [vmem:[#allocation2] sm:$0xff]
            %v1755 = vld [vmem:[#allocation2 + $0x8] sm:$0xff]
            %v1756 = vld [vmem:[#allocation2 + $0x10] sm:$0xff]
            %v1757 = vld [vmem:[#allocation2 + $0x18] sm:$0xff]
            %v1758 = vld [vmem:[#allocation2 + $0x20] sm:$0xff]
            %v1759 = vld [vmem:[#allocation2 + $0x28] sm:$0xff]
            %v1760 = vld [vmem:[#allocation2 + $0x30] sm:$0xff]
            %v1761 = vld [vmem:[#allocation2 + $0x38] sm:$0xff]
            %v1762 = vld [vmem:[#allocation2 + $0x40] sm:$0xff]
            %v1763 = vld [vmem:[#allocation2 + $0x48] sm:$0xff]
            %v1764 = vld [vmem:[#allocation2 + $0x50] sm:$0xff]
            %v1765 = vld [vmem:[#allocation2 + $0x58] sm:$0xff]
            %v1766 = vld [vmem:[#allocation2 + $0x60] sm:$0xff]
            %v1767 = vld [vmem:[#allocation2 + $0x68] sm:$0xff]
            %v1768 = vld [vmem:[#allocation2 + $0x70] sm:$0xff]
            %v1769 = vld [vmem:[#allocation2 + $0x78] sm:$0xff]
            %1771 = vset.pattern.permute.xlu0 0
            %1772 = vperm.xlu0 %1771, %v1065
            %v1773 = vpop.permute.xlu0 %1772
            %1776 = vset.pattern.permute.xlu0 0
            %1777 = vperm.xlu0 %1776, %v1066
            %v1778 = vpop.permute.xlu0 %1777
            %1781 = vset.pattern.permute.xlu0 0
            %1782 = vperm.xlu0 %1781, %v1067
            %v1783 = vpop.permute.xlu0 %1782
            %1786 = vset.pattern.permute.xlu0 0
            %1787 = vperm.xlu0 %1786, %v1068
            %v1788 = vpop.permute.xlu0 %1787
            %1791 = vset.pattern.permute.xlu0 0
            %1792 = vperm.xlu0 %1791, %v1069
            %v1793 = vpop.permute.xlu0 %1792
            %1796 = vset.pattern.permute.xlu0 0
            %1797 = vperm.xlu0 %1796, %v1070
            %v1798 = vpop.permute.xlu0 %1797
            %1801 = vset.pattern.permute.xlu0 0
            %1802 = vperm.xlu0 %1801, %v1071
            %v1803 = vpop.permute.xlu0 %1802
            %1806 = vset.pattern.permute.xlu0 0
            %1807 = vperm.xlu0 %1806, %v1072
            %v1808 = vpop.permute.xlu0 %1807
            %1811 = vset.pattern.permute.xlu0 0
            %1812 = vperm.xlu0 %1811, %v1073
            %v1813 = vpop.permute.xlu0 %1812
            %1816 = vset.pattern.permute.xlu0 0
            %1817 = vperm.xlu0 %1816, %v1074
            %v1818 = vpop.permute.xlu0 %1817
            %1821 = vset.pattern.permute.xlu0 0
            %1822 = vperm.xlu0 %1821, %v1075
            %v1823 = vpop.permute.xlu0 %1822
            %1826 = vset.pattern.permute.xlu0 0
            %1827 = vperm.xlu0 %1826, %v1076
            %v1828 = vpop.permute.xlu0 %1827
            %1831 = vset.pattern.permute.xlu0 0
            %1832 = vperm.xlu0 %1831, %v1077
            %v1833 = vpop.permute.xlu0 %1832
            %1836 = vset.pattern.permute.xlu0 0
            %1837 = vperm.xlu0 %1836, %v1078
            %v1838 = vpop.permute.xlu0 %1837
            %1841 = vset.pattern.permute.xlu0 0
            %1842 = vperm.xlu0 %1841, %v1079
            %v1843 = vpop.permute.xlu0 %1842
            %1846 = vset.pattern.permute.xlu0 0
            %1847 = vperm.xlu0 %1846, %v1080
            %v1848 = vpop.permute.xlu0 %1847
            %v1850 = vmul.f32 %v1754, %v1773
            %v1851 = vmul.f32 %v1755, %v1778
            %v1852 = vmul.f32 %v1756, %v1783
            %v1853 = vmul.f32 %v1757, %v1788
            %v1854 = vmul.f32 %v1758, %v1793
            %v1855 = vmul.f32 %v1759, %v1798
            %v1856 = vmul.f32 %v1760, %v1803
            %v1857 = vmul.f32 %v1761, %v1808
            %v1858 = vmul.f32 %v1762, %v1813
            %v1859 = vmul.f32 %v1763, %v1818
            %v1860 = vmul.f32 %v1764, %v1823
            %v1861 = vmul.f32 %v1765, %v1828
            %v1862 = vmul.f32 %v1766, %v1833
            %v1863 = vmul.f32 %v1767, %v1838
            %v1864 = vmul.f32 %v1768, %v1843
            %v1865 = vmul.f32 %v1769, %v1848
            %s1866 = sshra.s32 %s1064, 3
            %s1867 = sand.u32 %s1064, 7
            %s1868 = smul.addr %s1866, 4
            %s1869 = scalar_lea.vmem [#allocation3], %s1868
            %v1870 = vld [vmem:[%s1869] sm:$0xf]
            %v1871 = vld [vmem:[%s1869 + $0x4] sm:$0xf]
            %v1872 = vld [vmem:[%s1869 + $0x8] sm:$0xf]
            %v1873 = vld [vmem:[%s1869 + $0xc] sm:$0xf]
            %v1874 = vld [vmem:[%s1869 + $0x10] sm:$0xf]
            %v1875 = vld [vmem:[%s1869 + $0x14] sm:$0xf]
            %v1876 = vld [vmem:[%s1869 + $0x18] sm:$0xf]
            %v1877 = vld [vmem:[%s1869 + $0x1c] sm:$0xf]
            %v1878 = vld [vmem:[%s1869 + $0x20] sm:$0xf]
            %v1879 = vld [vmem:[%s1869 + $0x24] sm:$0xf]
            %v1880 = vld [vmem:[%s1869 + $0x28] sm:$0xf]
            %v1881 = vld [vmem:[%s1869 + $0x2c] sm:$0xf]
            %v1882 = vld [vmem:[%s1869 + $0x30] sm:$0xf]
            %v1883 = vld [vmem:[%s1869 + $0x34] sm:$0xf]
            %v1884 = vld [vmem:[%s1869 + $0x38] sm:$0xf]
            %v1885 = vld [vmem:[%s1869 + $0x3c] sm:$0xf]
            %v1886 = vpack.c.bf16 %v1851, %v1850
            %v1887 = vpack.c.bf16 %v1853, %v1852
            %v1888 = vpack.c.bf16 %v1855, %v1854
            %v1889 = vpack.c.bf16 %v1857, %v1856
            %v1890 = vpack.c.bf16 %v1859, %v1858
            %v1891 = vpack.c.bf16 %v1861, %v1860
            %v1892 = vpack.c.bf16 %v1863, %v1862
            %v1893 = vpack.c.bf16 %v1865, %v1864
            %v1894 = vld [vmem:[#allocation10] sm:$0xf]
            %v1895 = vld [vmem:[#allocation10 + $0x4] sm:$0xf]
            %v1896 = vld [vmem:[#allocation10 + $0x8] sm:$0xf]
            %v1897 = vld [vmem:[#allocation10 + $0xc] sm:$0xf]
            %v1898 = vld [vmem:[#allocation10 + $0x10] sm:$0xf]
            %v1899 = vld [vmem:[#allocation10 + $0x14] sm:$0xf]
            %v1900 = vld [vmem:[#allocation10 + $0x18] sm:$0xf]
            %v1901 = vld [vmem:[#allocation10 + $0x1c] sm:$0xf]
            %v1902 = vld [vmem:[#allocation10 + $0x20] sm:$0xf]
            %v1903 = vld [vmem:[#allocation10 + $0x24] sm:$0xf]
            %v1904 = vld [vmem:[#allocation10 + $0x28] sm:$0xf]
            %v1905 = vld [vmem:[#allocation10 + $0x2c] sm:$0xf]
            %v1906 = vld [vmem:[#allocation10 + $0x30] sm:$0xf]
            %v1907 = vld [vmem:[#allocation10 + $0x34] sm:$0xf]
            %v1908 = vld [vmem:[#allocation10 + $0x38] sm:$0xf]
            %v1909 = vld [vmem:[#allocation10 + $0x3c] sm:$0xf]
            %v1910 = vld [vmem:[#allocation11] sm:$0xf]
            %v1911 = vld [vmem:[#allocation11 + $0x4] sm:$0xf]
            %v1912 = vld [vmem:[#allocation11 + $0x8] sm:$0xf]
            %v1913 = vld [vmem:[#allocation11 + $0xc] sm:$0xf]
            %v1914 = vld [vmem:[#allocation11 + $0x10] sm:$0xf]
            %v1915 = vld [vmem:[#allocation11 + $0x14] sm:$0xf]
            %v1916 = vld [vmem:[#allocation11 + $0x18] sm:$0xf]
            %v1917 = vld [vmem:[#allocation11 + $0x1c] sm:$0xf]
            %v1918 = vld [vmem:[#allocation11 + $0x20] sm:$0xf]
            %v1919 = vld [vmem:[#allocation11 + $0x24] sm:$0xf]
            %v1920 = vld [vmem:[#allocation11 + $0x28] sm:$0xf]
            %v1921 = vld [vmem:[#allocation11 + $0x2c] sm:$0xf]
            %v1922 = vld [vmem:[#allocation11 + $0x30] sm:$0xf]
            %v1923 = vld [vmem:[#allocation11 + $0x34] sm:$0xf]
            %v1924 = vld [vmem:[#allocation11 + $0x38] sm:$0xf]
            %v1925 = vld [vmem:[#allocation11 + $0x3c] sm:$0xf]
            %v1942 = vunpack.c.l.b16 %v1870
            %v1943 = vunpack.c.l.b16 %v1871
            %v1944 = vunpack.c.l.b16 %v1872
            %v1945 = vunpack.c.l.b16 %v1873
            %v1946 = vunpack.c.l.b16 %v1874
            %v1947 = vunpack.c.l.b16 %v1875
            %v1948 = vunpack.c.l.b16 %v1876
            %v1949 = vunpack.c.l.b16 %v1877
            %v1950 = vunpack.c.l.b16 %v1878
            %v1951 = vunpack.c.l.b16 %v1879
            %v1952 = vunpack.c.l.b16 %v1880
            %v1953 = vunpack.c.l.b16 %v1881
            %v1954 = vunpack.c.l.b16 %v1882
            %v1955 = vunpack.c.l.b16 %v1883
            %v1956 = vunpack.c.l.b16 %v1884
            %v1957 = vunpack.c.l.b16 %v1885
            %v1958 = vpack.c.b16 %v1943, %v1942
            %v1959 = vpack.c.b16 %v1945, %v1944
            %v1960 = vpack.c.b16 %v1947, %v1946
            %v1961 = vpack.c.b16 %v1949, %v1948
            %v1962 = vpack.c.b16 %v1951, %v1950
            %v1963 = vpack.c.b16 %v1953, %v1952
            %v1964 = vpack.c.b16 %v1955, %v1954
            %v1965 = vpack.c.b16 %v1957, %v1956
            %v1990 = vunpack.c.l.b16 %v1910
            %v1991 = vunpack.c.l.b16 %v1911
            %v1992 = vunpack.c.l.b16 %v1912
            %v1993 = vunpack.c.l.b16 %v1913
            %v1994 = vunpack.c.l.b16 %v1914
            %v1995 = vunpack.c.l.b16 %v1915
            %v1996 = vunpack.c.l.b16 %v1916
            %v1997 = vunpack.c.l.b16 %v1917
            %v1998 = vunpack.c.l.b16 %v1918
            %v1999 = vunpack.c.l.b16 %v1919
            %v2000 = vunpack.c.l.b16 %v1920
            %v2001 = vunpack.c.l.b16 %v1921
            %v2002 = vunpack.c.l.b16 %v1922
            %v2003 = vunpack.c.l.b16 %v1923
            %v2004 = vunpack.c.l.b16 %v1924
            %v2005 = vunpack.c.l.b16 %v1925
            %v2006 = vpack.c.b16 %v1991, %v1990
            %v2007 = vpack.c.b16 %v1993, %v1992
            %v2008 = vpack.c.b16 %v1995, %v1994
            %v2009 = vpack.c.b16 %v1997, %v1996
            %v2010 = vpack.c.b16 %v1999, %v1998
            %v2011 = vpack.c.b16 %v2001, %v2000
            %v2012 = vpack.c.b16 %v2003, %v2002
            %v2013 = vpack.c.b16 %v2005, %v2004
            %2022 = vmatprep.subr.bf16.mxu0 0
            %2023 = vmatpush1.bf16.msra.mxu0 %v2013
            %2024 = vmatprep.subr.bf16.mxu0 0
            %2025 = vmatpush1.bf16.msra.mxu0 %v2012
            %2026 = vmatprep.subr.bf16.mxu0 0
            %2027 = vmatpush1.bf16.msra.mxu0 %v2011
            %2028 = vmatprep.subr.bf16.mxu0 0
            %2029 = vmatpush1.bf16.msra.mxu0 %v2010
            %2030 = vmatprep.subr.bf16.mxu0 0
            %2031 = vmatpush1.bf16.msra.mxu0 %v2009
            %2032 = vmatprep.subr.bf16.mxu0 0
            %2033 = vmatpush1.bf16.msra.mxu0 %v2008
            %2034 = vmatprep.subr.bf16.mxu0 0
            %2035 = vmatpush1.bf16.msra.mxu0 %v2007
            %2036 = vmatprep.subr.bf16.mxu0 0
            %2037 = vmatpush1.bf16.msra.mxu0 %v2006
            %2038 = vmatprep.subr.bf16.mxu0 0
            %2039 = vmatpush2.bf16.msra.mxu0 0
            %2040 = vmatprep.subr.bf16.mxu0 0
            %2041 = vmatpush2.bf16.msra.mxu0 0
            %2042 = vmatprep.subr.bf16.mxu0 0
            %2043 = vmatpush2.bf16.msra.mxu0 0
            %2044 = vmatprep.subr.bf16.mxu0 0
            %2045 = vmatpush2.bf16.msra.mxu0 0
            %2046 = vmatprep.subr.bf16.mxu0 0
            %2047 = vmatpush2.bf16.msra.mxu0 0
            %2048 = vmatprep.subr.bf16.mxu0 0
            %2049 = vmatpush2.bf16.msra.mxu0 0
            %2050 = vmatprep.subr.bf16.mxu0 0
            %2051 = vmatpush2.bf16.msra.mxu0 0
            %2052 = vmatprep.subr.bf16.mxu0 0
            %2053 = vmatpush2.bf16.msra.mxu0 0
            %2054 = vmatprep.mubr.bf16.mxu0 0
            %2055 = vmatmul.mubr.bf16.gmra.mxu0 %v1958
            %v2056 = vpop.f32.mrf.mxu0
            %v2057 = vadd.f32 0.0, %v2056
            %v2058 = vpop.f32.mrf.mxu0
            %v2059 = vpop.f32.mrf.mxu0
            %v2060 = vadd.f32 0.0, %v2059
            %v2061 = vpop.f32.mrf.mxu0
            %2062 = vmatprep.mubr.bf16.mxu0 0
            %2063 = vmatmul.mubr.bf16.gmra.mxu0 %v1959
            %v2064 = vpop.f32.mrf.mxu0
            %v2065 = vadd.f32 0.0, %v2064
            %v2066 = vpop.f32.mrf.mxu0
            %v2067 = vpop.f32.mrf.mxu0
            %v2068 = vadd.f32 0.0, %v2067
            %v2069 = vpop.f32.mrf.mxu0
            %2070 = vmatprep.mubr.bf16.mxu0 0
            %2071 = vmatmul.mubr.bf16.gmra.mxu0 %v1960
            %v2072 = vpop.f32.mrf.mxu0
            %v2073 = vadd.f32 0.0, %v2072
            %v2074 = vpop.f32.mrf.mxu0
            %v2075 = vpop.f32.mrf.mxu0
            %v2076 = vadd.f32 0.0, %v2075
            %v2077 = vpop.f32.mrf.mxu0
            %2078 = vmatprep.mubr.bf16.mxu0 0
            %2079 = vmatmul.mubr.bf16.gmra.mxu0 %v1961
            %v2080 = vpop.f32.mrf.mxu0
            %v2081 = vadd.f32 0.0, %v2080
            %v2082 = vpop.f32.mrf.mxu0
            %v2083 = vpop.f32.mrf.mxu0
            %v2084 = vadd.f32 0.0, %v2083
            %v2085 = vpop.f32.mrf.mxu0
            %2086 = vmatprep.mubr.bf16.mxu0 0
            %2087 = vmatmul.mubr.bf16.gmra.mxu0 %v1962
            %v2088 = vpop.f32.mrf.mxu0
            %v2089 = vadd.f32 0.0, %v2088
            %v2090 = vpop.f32.mrf.mxu0
            %v2091 = vpop.f32.mrf.mxu0
            %v2092 = vadd.f32 0.0, %v2091
            %v2093 = vpop.f32.mrf.mxu0
            %2094 = vmatprep.mubr.bf16.mxu0 0
            %2095 = vmatmul.mubr.bf16.gmra.mxu0 %v1963
            %v2096 = vpop.f32.mrf.mxu0
            %v2097 = vadd.f32 0.0, %v2096
            %v2098 = vpop.f32.mrf.mxu0
            %v2099 = vpop.f32.mrf.mxu0
            %v2100 = vadd.f32 0.0, %v2099
            %v2101 = vpop.f32.mrf.mxu0
            %2102 = vmatprep.mubr.bf16.mxu0 0
            %2103 = vmatmul.mubr.bf16.gmra.mxu0 %v1964
            %v2104 = vpop.f32.mrf.mxu0
            %v2105 = vadd.f32 0.0, %v2104
            %v2106 = vpop.f32.mrf.mxu0
            %v2107 = vpop.f32.mrf.mxu0
            %v2108 = vadd.f32 0.0, %v2107
            %v2109 = vpop.f32.mrf.mxu0
            %2110 = vmatprep.mubr.bf16.mxu0 0
            %2111 = vmatmul.mubr.bf16.gmra.mxu0 %v1965
            %v2112 = vpop.f32.mrf.mxu0
            %v2113 = vadd.f32 0.0, %v2112
            %v2114 = vpop.f32.mrf.mxu0
            %v2115 = vpop.f32.mrf.mxu0
            %v2116 = vadd.f32 0.0, %v2115
            %v2117 = vpop.f32.mrf.mxu0
            %2118 = vdwg.mxu0
            %v2135 = vunpack.c.l.b16 %v1894
            %v2136 = vunpack.c.l.b16 %v1895
            %v2137 = vunpack.c.l.b16 %v1896
            %v2138 = vunpack.c.l.b16 %v1897
            %v2139 = vunpack.c.l.b16 %v1898
            %v2140 = vunpack.c.l.b16 %v1899
            %v2141 = vunpack.c.l.b16 %v1900
            %v2142 = vunpack.c.l.b16 %v1901
            %v2143 = vunpack.c.l.b16 %v1902
            %v2144 = vunpack.c.l.b16 %v1903
            %v2145 = vunpack.c.l.b16 %v1904
            %v2146 = vunpack.c.l.b16 %v1905
            %v2147 = vunpack.c.l.b16 %v1906
            %v2148 = vunpack.c.l.b16 %v1907
            %v2149 = vunpack.c.l.b16 %v1908
            %v2150 = vunpack.c.l.b16 %v1909
            %v2151 = vpack.c.b16 %v2136, %v2135
            %v2152 = vpack.c.b16 %v2138, %v2137
            %v2153 = vpack.c.b16 %v2140, %v2139
            %v2154 = vpack.c.b16 %v2142, %v2141
            %v2155 = vpack.c.b16 %v2144, %v2143
            %v2156 = vpack.c.b16 %v2146, %v2145
            %v2157 = vpack.c.b16 %v2148, %v2147
            %v2158 = vpack.c.b16 %v2150, %v2149
            %2167 = vmatprep.subr.bf16.mxu0 0
            %2168 = vmatpush1.bf16.msra.mxu0 %v2158
            %2169 = vmatprep.subr.bf16.mxu0 0
            %2170 = vmatpush1.bf16.msra.mxu0 %v2157
            %2171 = vmatprep.subr.bf16.mxu0 0
            %2172 = vmatpush1.bf16.msra.mxu0 %v2156
            %2173 = vmatprep.subr.bf16.mxu0 0
            %2174 = vmatpush1.bf16.msra.mxu0 %v2155
            %2175 = vmatprep.subr.bf16.mxu0 0
            %2176 = vmatpush1.bf16.msra.mxu0 %v2154
            %2177 = vmatprep.subr.bf16.mxu0 0
            %2178 = vmatpush1.bf16.msra.mxu0 %v2153
            %2179 = vmatprep.subr.bf16.mxu0 0
            %2180 = vmatpush1.bf16.msra.mxu0 %v2152
            %2181 = vmatprep.subr.bf16.mxu0 0
            %2182 = vmatpush1.bf16.msra.mxu0 %v2151
            %2183 = vmatprep.subr.bf16.mxu0 0
            %2184 = vmatpush2.bf16.msra.mxu0 0
            %2185 = vmatprep.subr.bf16.mxu0 0
            %2186 = vmatpush2.bf16.msra.mxu0 0
            %2187 = vmatprep.subr.bf16.mxu0 0
            %2188 = vmatpush2.bf16.msra.mxu0 0
            %2189 = vmatprep.subr.bf16.mxu0 0
            %2190 = vmatpush2.bf16.msra.mxu0 0
            %2191 = vmatprep.subr.bf16.mxu0 0
            %2192 = vmatpush2.bf16.msra.mxu0 0
            %2193 = vmatprep.subr.bf16.mxu0 0
            %2194 = vmatpush2.bf16.msra.mxu0 0
            %2195 = vmatprep.subr.bf16.mxu0 0
            %2196 = vmatpush2.bf16.msra.mxu0 0
            %2197 = vmatprep.subr.bf16.mxu0 0
            %2198 = vmatpush2.bf16.msra.mxu0 0
            %2199 = vmatprep.mubr.bf16.mxu0 0
            %2200 = vmatmul.mubr.bf16.gmra.mxu0 %v1886
            %v2201 = vpop.f32.mrf.mxu0
            %v2202 = vadd.f32 %v2057, %v2201
            %v2203 = vpop.f32.mrf.mxu0
            %v2204 = vpop.f32.mrf.mxu0
            %v2205 = vadd.f32 %v2060, %v2204
            %v2206 = vpop.f32.mrf.mxu0
            %2207 = vmatprep.mubr.bf16.mxu0 0
            %2208 = vmatmul.mubr.bf16.gmra.mxu0 %v1887
            %v2209 = vpop.f32.mrf.mxu0
            %v2210 = vadd.f32 %v2065, %v2209
            %v2211 = vpop.f32.mrf.mxu0
            %v2212 = vpop.f32.mrf.mxu0
            %v2213 = vadd.f32 %v2068, %v2212
            %v2214 = vpop.f32.mrf.mxu0
            %2215 = vmatprep.mubr.bf16.mxu0 0
            %2216 = vmatmul.mubr.bf16.gmra.mxu0 %v1888
            %v2217 = vpop.f32.mrf.mxu0
            %v2218 = vadd.f32 %v2073, %v2217
            %v2219 = vpop.f32.mrf.mxu0
            %v2220 = vpop.f32.mrf.mxu0
            %v2221 = vadd.f32 %v2076, %v2220
            %v2222 = vpop.f32.mrf.mxu0
            %2223 = vmatprep.mubr.bf16.mxu0 0
            %2224 = vmatmul.mubr.bf16.gmra.mxu0 %v1889
            %v2225 = vpop.f32.mrf.mxu0
            %v2226 = vadd.f32 %v2081, %v2225
            %v2227 = vpop.f32.mrf.mxu0
            %v2228 = vpop.f32.mrf.mxu0
            %v2229 = vadd.f32 %v2084, %v2228
            %v2230 = vpop.f32.mrf.mxu0
            %2231 = vmatprep.mubr.bf16.mxu0 0
            %2232 = vmatmul.mubr.bf16.gmra.mxu0 %v1890
            %v2233 = vpop.f32.mrf.mxu0
            %v2234 = vadd.f32 %v2089, %v2233
            %v2235 = vpop.f32.mrf.mxu0
            %v2236 = vpop.f32.mrf.mxu0
            %v2237 = vadd.f32 %v2092, %v2236
            %v2238 = vpop.f32.mrf.mxu0
            %2239 = vmatprep.mubr.bf16.mxu0 0
            %2240 = vmatmul.mubr.bf16.gmra.mxu0 %v1891
            %v2241 = vpop.f32.mrf.mxu0
            %v2242 = vadd.f32 %v2097, %v2241
            %v2243 = vpop.f32.mrf.mxu0
            %v2244 = vpop.f32.mrf.mxu0
            %v2245 = vadd.f32 %v2100, %v2244
            %v2246 = vpop.f32.mrf.mxu0
            %2247 = vmatprep.mubr.bf16.mxu0 0
            %2248 = vmatmul.mubr.bf16.gmra.mxu0 %v1892
            %v2249 = vpop.f32.mrf.mxu0
            %v2250 = vadd.f32 %v2105, %v2249
            %v2251 = vpop.f32.mrf.mxu0
            %v2252 = vpop.f32.mrf.mxu0
            %v2253 = vadd.f32 %v2108, %v2252
            %v2254 = vpop.f32.mrf.mxu0
            %2255 = vmatprep.mubr.bf16.mxu0 0
            %2256 = vmatmul.mubr.bf16.gmra.mxu0 %v1893
            %v2257 = vpop.f32.mrf.mxu0
            %v2258 = vadd.f32 %v2113, %v2257
            %v2259 = vpop.f32.mrf.mxu0
            %v2260 = vpop.f32.mrf.mxu0
            %v2261 = vadd.f32 %v2116, %v2260
            %v2262 = vpop.f32.mrf.mxu0
            %2263 = vdwg.mxu0
            %v2264 = vld [vmem:[%s8] sm:$0x1]
            %v2266 = vlaneseq
            %v2267 = vshrl.u32 %v2266, 7
            %v2268 = vsub.s32 0, %v2267
            %v2269 = vrot.slane %v2264, %v2268
            %v2271 = vadd.f32 %v2202, %v2269
            %v2272 = vadd.f32 %v2205, %v2269
            %v2273 = vadd.f32 %v2210, %v2269
            %v2274 = vadd.f32 %v2213, %v2269
            %v2275 = vadd.f32 %v2218, %v2269
            %v2276 = vadd.f32 %v2221, %v2269
            %v2277 = vadd.f32 %v2226, %v2269
            %v2278 = vadd.f32 %v2229, %v2269
            %v2279 = vadd.f32 %v2234, %v2269
            %v2280 = vadd.f32 %v2237, %v2269
            %v2281 = vadd.f32 %v2242, %v2269
            %v2282 = vadd.f32 %v2245, %v2269
            %v2283 = vadd.f32 %v2250, %v2269
            %v2284 = vadd.f32 %v2253, %v2269
            %v2285 = vadd.f32 %v2258, %v2269
            %v2286 = vadd.f32 %v2261, %v2269
            %2287 = vst [vmem:[%s472] sm:$0xff] %v2271
            %2288 = vst [vmem:[%s472 + $0x8] sm:$0xff] %v2272
            %2289 = vst [vmem:[%s472 + $0x10] sm:$0xff] %v2273
            %2290 = vst [vmem:[%s472 + $0x18] sm:$0xff] %v2274
            %2291 = vst [vmem:[%s472 + $0x20] sm:$0xff] %v2275
            %2292 = vst [vmem:[%s472 + $0x28] sm:$0xff] %v2276
            %2293 = vst [vmem:[%s472 + $0x30] sm:$0xff] %v2277
            %2294 = vst [vmem:[%s472 + $0x38] sm:$0xff] %v2278
            %2295 = vst [vmem:[%s472 + $0x40] sm:$0xff] %v2279
            %2296 = vst [vmem:[%s472 + $0x48] sm:$0xff] %v2280
            %2297 = vst [vmem:[%s472 + $0x50] sm:$0xff] %v2281
            %2298 = vst [vmem:[%s472 + $0x58] sm:$0xff] %v2282
            %2299 = vst [vmem:[%s472 + $0x60] sm:$0xff] %v2283
            %2300 = vst [vmem:[%s472 + $0x68] sm:$0xff] %v2284
            %2301 = vst [vmem:[%s472 + $0x70] sm:$0xff] %v2285
            %2302 = vst [vmem:[%s472 + $0x78] sm:$0xff] %v2286
            %v2303 = vld [vmem:[#allocation4] sm:$0xff]
            %v2304 = vld [vmem:[#allocation4 + $0x8] sm:$0xff]
            %v2305 = vld [vmem:[#allocation4 + $0x10] sm:$0xff]
            %v2306 = vld [vmem:[#allocation4 + $0x18] sm:$0xff]
            %v2307 = vld [vmem:[#allocation4 + $0x20] sm:$0xff]
            %v2308 = vld [vmem:[#allocation4 + $0x28] sm:$0xff]
            %v2309 = vld [vmem:[#allocation4 + $0x30] sm:$0xff]
            %v2310 = vld [vmem:[#allocation4 + $0x38] sm:$0xff]
            %v2311 = vld [vmem:[#allocation4 + $0x40] sm:$0xff]
            %v2312 = vld [vmem:[#allocation4 + $0x48] sm:$0xff]
            %v2313 = vld [vmem:[#allocation4 + $0x50] sm:$0xff]
            %v2314 = vld [vmem:[#allocation4 + $0x58] sm:$0xff]
            %v2315 = vld [vmem:[#allocation4 + $0x60] sm:$0xff]
            %v2316 = vld [vmem:[#allocation4 + $0x68] sm:$0xff]
            %v2317 = vld [vmem:[#allocation4 + $0x70] sm:$0xff]
            %v2318 = vld [vmem:[#allocation4 + $0x78] sm:$0xff]
            %2319 = vst [vmem:[%s465] sm:$0xff] %v2303
            %2320 = vst [vmem:[%s465 + $0x8] sm:$0xff] %v2304
            %2321 = vst [vmem:[%s465 + $0x10] sm:$0xff] %v2305
            %2322 = vst [vmem:[%s465 + $0x18] sm:$0xff] %v2306
            %2323 = vst [vmem:[%s465 + $0x20] sm:$0xff] %v2307
            %2324 = vst [vmem:[%s465 + $0x28] sm:$0xff] %v2308
            %2325 = vst [vmem:[%s465 + $0x30] sm:$0xff] %v2309
            %2326 = vst [vmem:[%s465 + $0x38] sm:$0xff] %v2310
            %2327 = vst [vmem:[%s465 + $0x40] sm:$0xff] %v2311
            %2328 = vst [vmem:[%s465 + $0x48] sm:$0xff] %v2312
            %2329 = vst [vmem:[%s465 + $0x50] sm:$0xff] %v2313
            %2330 = vst [vmem:[%s465 + $0x58] sm:$0xff] %v2314
            %2331 = vst [vmem:[%s465 + $0x60] sm:$0xff] %v2315
            %2332 = vst [vmem:[%s465 + $0x68] sm:$0xff] %v2316
            %2333 = vst [vmem:[%s465 + $0x70] sm:$0xff] %v2317
            %2334 = vst [vmem:[%s465 + $0x78] sm:$0xff] %v2318
          $region100: #{tpu_custom_call.1} parent=87 // pred_fallthru
            _
        $region88: #{tpu_custom_call.1} parent=55 // pred_fallthru
          _
        %s2335 = sand.u32 %s263, 1
        %s2336 = scalar_lea.sflag [#allocation7], %s2335
        %s2337 = sand.u32 %s263, 1
        %s2338 = smul.addr %s2337, 128
        %s2339 = scalar_lea.vmem [#allocation13], %s2338
        %s2340 = sand.u32 %s291, 1
        %s2341 = scalar_lea.sflag [#allocation15], %s2340
        %s2342 = sand.u32 %s291, 1
        %s2343 = smul.addr %s2342, 128
        %s2344 = scalar_lea.vmem [#allocation14], %s2343
        // Predicated region
        $region101: #{tpu_custom_call.1} parent=55 // pred_check
          %p2345 = pneg %p273
        $region102: #{tpu_custom_call.1} parent=55 // pred_check_branch
          %2347 = sbr.rel (%p2345) target = $region104
        $region103: #{tpu_custom_call.1} parent=55 // pred_region
          %s2348 = ssub.s32 1, %s36
          %s2349 = smul.u32 %s37, %s2348
          %s2350 = smul.u32 16, %s2349
          %s2352 = ssub.s32 2048, 2048
          %2353 = vsyncadd %s2336, %s2352
          %s2354 = smul.addr %s2350, 128
          %s2355 = scalar_lea.hbm %s9, %s2354
          %s2356 = sshll.u32 %s2339, 4
          %s2357 = int_to_ptr.vmem [resolvable:$true] %s2356
          %2362 = dma.vmem_to_hbm [thread:$0]  %s2357, 2048, %s2355, %s2336, 128, 128, 8
        $region104: #{tpu_custom_call.1} parent=55 // pred_fallthru
          _
        // Predicated region
        $region105: #{tpu_custom_call.1} parent=55 // pred_check
          %p2363 = pneg %p301
        $region106: #{tpu_custom_call.1} parent=55 // pred_check_branch
          %2365 = sbr.rel (%p2363) target = $region108
        $region107: #{tpu_custom_call.1} parent=55 // pred_region
          %s2366 = smul.u32 %s37, %s36
          %s2367 = smul.u32 16, %s2366
          %s2369 = ssub.s32 2048, 2048
          %2370 = vsyncadd %s2341, %s2369
          %s2371 = smul.addr %s2367, 128
          %s2372 = scalar_lea.hbm %s10, %s2371
          %s2373 = sshll.u32 %s2344, 4
          %s2374 = int_to_ptr.vmem [resolvable:$true] %s2373
          %2379 = dma.vmem_to_hbm [thread:$0]  %s2374, 2048, %s2372, %s2341, 128, 128, 8
        $region108: #{tpu_custom_call.1} parent=55 // pred_fallthru
          _
      $region56: #{tpu_custom_call.1} parent=5 // pred_fallthru
        _
      %p2380 = scmp.le.s32.totalorder 2, %s26
      // Predicated region
      $region109: #{tpu_custom_call.1} parent=5 // pred_check
        %p2381 = pneg %p2380
      $region110: #{tpu_custom_call.1} parent=5 // pred_check_branch
        %2383 = sbr.rel (%p2381) target = $region112
      $region111: #{tpu_custom_call.1} parent=5 // pred_region
        %s2384 = ssub.s32 %s26, 2
        // Predicated region
        $region113: #{tpu_custom_call.1} parent=111 // pred_check
          %p2385 = pneg %p279
        $region114: #{tpu_custom_call.1} parent=111 // pred_check_branch
          %2387 = sbr.rel (%p2385) target = $region116
        $region115: #{tpu_custom_call.1} parent=111 // pred_region
          %s2388 = sand.u32 %s264, 1
          %s2389 = scalar_lea.sflag [#allocation7], %s2388
          %s2390 = sand.u32 %s264, 1
          %s2391 = smul.addr %s2390, 128
          %s2392 = scalar_lea.vmem [#allocation13], %s2391
          %2393 = dma.done %s2389, 2048
        $region116: #{tpu_custom_call.1} parent=111 // pred_fallthru
          _
        // Predicated region
        $region117: #{tpu_custom_call.1} parent=111 // pred_check
          %p2394 = pneg %p307
        $region118: #{tpu_custom_call.1} parent=111 // pred_check_branch
          %2396 = sbr.rel (%p2394) target = $region120
        $region119: #{tpu_custom_call.1} parent=111 // pred_region
          %s2397 = sand.u32 %s292, 1
          %s2398 = scalar_lea.sflag [#allocation15], %s2397
          %s2399 = sand.u32 %s292, 1
          %s2400 = smul.addr %s2399, 128
          %s2401 = scalar_lea.vmem [#allocation14], %s2400
          %2402 = dma.done %s2398, 2048
        $region120: #{tpu_custom_call.1} parent=111 // pred_fallthru
          _
      $region112: #{tpu_custom_call.1} parent=5 // pred_fallthru
        _
    $region6: #{tpu_custom_call.1} parent=1 // loop_footer
      %s30 = sadd.s32 1, %s26
    $region7: #{tpu_custom_call.1} parent=1 // loop_footer_branch
      %25 = sbr.rel target = $region3
    $region8: #{tpu_custom_call.1} parent=1 // loop_exit
      _
    %2403 = vsyncpa [#allocation6], 1
    %s2404 = scalar_lea.sflag [#allocation6], 1
    %2405 = vsyncpa %s2404, 1
    %2406 = vsyncpa [#allocation9], 1
    %2407 = vsyncpa [#allocation12], 1
    %2408 = vsyncpa [#allocation7], 1
    %s2409 = scalar_lea.sflag [#allocation7], 1
    %2410 = vsyncpa %s2409, 1
    %2411 = vsyncpa [#allocation15], 1
    %s2412 = scalar_lea.sflag [#allocation15], 1
    %2413 = vsyncpa %s2412, 1

</llo_original>
